<compile_context>
chip_gen: v6e
topology: v6e:2x2x1
jax: 0.10.0
libtpu: 0.0.40
codegen_flags: <defaults>
</compile_context>

<pallas_src>
import functools
import math

import jax
import jax.numpy as jnp
from jax.experimental import pallas as pl
from jax.experimental.pallas import tpu as pltpu


def encoder_block_kernel(x_ref,
                         wq_ref, wk_ref, wv_ref, wo_ref,
                         w1_ref, b1_ref, w2_ref, b2_ref, w3_ref, b3_ref,
                         w4_ref, b4_ref, w5_ref, b5_ref,
                         ln1_a_ref, ln1_b_ref, ln2_a_ref, ln2_b_ref,
                         o_ref,
                         *, h, d_k):
    xb = x_ref[...].astype(jnp.float32)          # (bt, S, D) batch-tile
    bt, S, D = xb.shape
    M = bt * S
    # Flatten rows so every matmul sees M = bt*S (S=8 is sublane-aligned, so
    # this reshape is layout-trivial).
    x = xb.reshape(M, D)
    eps = 1e-6

    def layer_norm(v, alpha, bias):
        # torch semantics: unbiased std (divide by D-1), alpha*(x-mean)/(std+eps)+bias
        mean = jnp.mean(v, axis=-1, keepdims=True)
        var = jnp.sum((v - mean) ** 2, axis=-1, keepdims=True) * (1.0 / (D - 1))
        inv = pl.reciprocal(jnp.sqrt(var) + eps, approx=True)   # EUP, not VALU
        return alpha * (v - mean) * inv + bias

    def mm(a_f32, w_ref):
        # bf16 MXU operands, f32 accumulation
        return jnp.dot(a_f32.astype(jnp.bfloat16), w_ref[...],
                       preferred_element_type=jnp.float32)

    # ------------- residual connection 0: pre-norm self-attention -------------
    xn = layer_norm(x, ln1_a_ref[...], ln1_b_ref[...])
    xn_b = xn.astype(jnp.bfloat16)
    q = jnp.dot(xn_b, wq_ref[...], preferred_element_type=jnp.float32)
    k = jnp.dot(xn_b, wk_ref[...], preferred_element_type=jnp.float32)
    v = jnp.dot(xn_b, wv_ref[...], preferred_element_type=jnp.float32)

    # Fold 1/sqrt(d_k) into q: M*D multiplies instead of h*S^2 on the scores.
    q = q * (1.0 / math.sqrt(d_k))

    q3 = q.reshape(bt, S, D).astype(jnp.bfloat16)
    k3 = k.reshape(bt, S, D).astype(jnp.bfloat16)
    v3 = v.reshape(bt, S, D).astype(jnp.bfloat16)

    # Per-head outputs are folded straight into the w_o projection (no lane-axis
    # concatenate).  h is tiny, so a small static loop is fine.
    # TODO(synk): for large S, tile over KV blocks with an online-softmax
    # accumulator (flash-attention) instead of full (S,S) scores per head.
    attn = jnp.zeros((M, D), jnp.float32)
    for hi in range(h):
        sl = slice(hi * d_k, (hi + 1) * d_k)
        qh = q3[:, :, sl]                                        # (bt, S, d_k)
        kh = k3[:, :, sl]
        vh = v3[:, :, sl]
        s = jnp.einsum('bqd,bkd->bqk', qh, kh,
                       preferred_element_type=jnp.float32)       # (bt, S, S)
        # src_mask is None in this instantiation
        s = s - jnp.max(s, axis=-1, keepdims=True)
        p = jnp.exp(s)
        p = p * pl.reciprocal(jnp.sum(p, axis=-1, keepdims=True), approx=True)
        oh = jnp.einsum('bqk,bkd->bqd', p.astype(jnp.bfloat16), vh,
                        preferred_element_type=jnp.float32)      # (bt, S, d_k)
        attn = attn + jnp.dot(oh.reshape(M, d_k).astype(jnp.bfloat16),
                              wo_ref[hi],                        # (d_k, D) bf16
                              preferred_element_type=jnp.float32)
    x = x + attn

    # ------------- residual connection 1: pre-norm feed-forward -------------
    xn = layer_norm(x, ln2_a_ref[...], ln2_b_ref[...])
    hdd = mm(xn, w1_ref) + b1_ref[...]
    hdd = mm(jnp.maximum(hdd, 0.0), w2_ref) + b2_ref[...]
    hdd = mm(jnp.maximum(hdd, 0.0), w3_ref) + b3_ref[...]
    hdd = mm(jnp.maximum(hdd, 0.0), w4_ref) + b4_ref[...]
    ff = mm(jnp.maximum(hdd, 0.0), w5_ref) + b5_ref[...]
    x = x + ff

    o_ref[...] = x.reshape(bt, S, D).astype(o_ref.dtype)


def encoder_block(x, params, h):
    B, S, D = x.shape
    d_k = D // h

    # Batch-tile: pack several batch elements per grid step so the matmul M dim
    # is bt*S (~256 rows target).  For B=2, S=8 this collapses to a single
    # invocation over all 16 rows; at larger B the grid has multiple "parallel"
    # steps (v7x megacore).
    bt = max(1, min(B, 256 // max(S, 1)))
    while B % bt:
        bt -= 1
    grid = (B // bt,)

    # w_o pre-split per head: (h, d_k, D) so each head's partial projection is a
    # simple leading-dim ref index in the kernel (no concatenate, no unaligned
    # sublane slicing of a bf16 weight).
    wo_h = params["wo"].reshape(h, d_k, D)

    ordered = [
        params["wq"], params["wk"], params["wv"], wo_h,
        params["w1"], params["b1"], params["w2"], params["b2"],
        params["w3"], params["b3"], params["w4"], params["b4"],
        params["w5"], params["b5"],
        params["ln1_a"], params["ln1_b"], params["ln2_a"], params["ln2_b"],
    ]

    def full_spec(a):
        # whole (tiny, grid-invariant) array resident in VMEM every step
        return pl.BlockSpec(a.shape, lambda i: (0,) * a.ndim)

    in_specs = ([pl.BlockSpec((bt, S, D), lambda i: (i, 0, 0))]
                + [full_spec(a) for a in ordered])

    kernel = functools.partial(encoder_block_kernel, h=h, d_k=d_k)

    return pl.pallas_call(
        kernel,
        out_shape=jax.ShapeDtypeStruct((B, S, D), x.dtype),
        grid=grid,
        in_specs=in_specs,
        out_specs=pl.BlockSpec((bt, S, D), lambda i: (i, 0, 0)),
        compiler_params=pltpu.CompilerParams(
            dimension_semantics=("parallel",),
            # generous but well under physical VMEM on v5e/v6e/v7x; actual
            # footprint at these sizes is tiny (bf16 weights + small blocks)
            vmem_limit_bytes=32 * 1024 * 1024),
    )(x, *ordered)


def encoder_block_ref(x, params, h):
    """Pure-JAX f32 reference implementing the same math (sanity check)."""
    B, S, D = x.shape
    d_k = D // h
    eps = 1e-6
    f32 = lambda a: a.astype(jnp.float32)

    def ln(v, a, b):
        mean = jnp.mean(v, axis=-1, keepdims=True)
        var = jnp.sum((v - mean) ** 2, axis=-1, keepdims=True) / (D - 1)
        return a[0] * (v - mean) / (jnp.sqrt(var) + eps) + b[0]

    xn = ln(x, params["ln1_a"], params["ln1_b"])
    q = xn @ f32(params["wq"])
    k = xn @ f32(params["wk"])
    v = xn @ f32(params["wv"])
    q = q.reshape(B, S, h, d_k).transpose(0, 2, 1, 3)
    k = k.reshape(B, S, h, d_k).transpose(0, 2, 1, 3)
    v = v.reshape(B, S, h, d_k).transpose(0, 2, 1, 3)
    scores = jnp.einsum("bhqd,bhkd->bhqk", q, k) / jnp.sqrt(jnp.float32(d_k))
    p = jax.nn.softmax(scores, axis=-1)
    a = jnp.einsum("bhqk,bhkd->bhqd", p, v).transpose(0, 2, 1, 3).reshape(B, S, D)
    x = x + a @ f32(params["wo"])

    xn = ln(x, params["ln2_a"], params["ln2_b"])
    hdd = xn @ f32(params["w1"]) + params["b1"][0]
    hdd = jnp.maximum(hdd, 0.0) @ f32(params["w2"]) + params["b2"][0]
    hdd = jnp.maximum(hdd, 0.0) @ f32(params["w3"]) + params["b3"][0]
    hdd = jnp.maximum(hdd, 0.0) @ f32(params["w4"]) + params["b4"][0]
    ff = jnp.maximum(hdd, 0.0) @ f32(params["w5"]) + params["b5"][0]
    return x + ff


def init_params(key, d_model, d_ff):
    ks = jax.random.split(key, 16)

    def mat(k, shape, scale, dtype=jnp.bfloat16):
        w = jax.random.normal(k, shape, jnp.float32) * scale
        return w.astype(dtype)

    # Matmul weights stored pre-transposed (in_dim, out_dim) and in bf16 for the
    # MXU; biases and LayerNorm params stay f32 (added after f32 accumulation).
    return {
        "wq": mat(ks[0], (d_model, d_model), 0.08),
        "wk": mat(ks[1], (d_model, d_model), 0.08),
        "wv": mat(ks[2], (d_model, d_model), 0.08),
        "wo": mat(ks[3], (d_model, d_model), 0.08),
        "w1": mat(ks[4], (d_model, d_ff), 0.08),
        "w2": mat(ks[6], (d_ff, d_ff), 0.08),
        "w3": mat(ks[8], (d_ff, d_ff), 0.08),
        "w4": mat(ks[10], (d_ff, d_ff), 0.08),
        "w5": mat(ks[12], (d_ff, d_model), 0.08),
        "b1": mat(ks[5], (1, d_ff), 0.02, jnp.float32),
        "b2": mat(ks[7], (1, d_ff), 0.02, jnp.float32),
        "b3": mat(ks[9], (1, d_ff), 0.02, jnp.float32),
        "b4": mat(ks[11], (1, d_ff), 0.02, jnp.float32),
        "b5": mat(ks[13], (1, d_model), 0.02, jnp.float32),
        "ln1_a": jnp.ones((1, d_model), jnp.float32),
        "ln1_b": jnp.zeros((1, d_model), jnp.float32),
        "ln2_a": jnp.ones((1, d_model), jnp.float32),
        "ln2_b": jnp.zeros((1, d_model), jnp.float32),
    }


if __name__ == "__main__":
    B, S, D = 2, 8, 32      # batch, sequence, d_model
    H = 4                   # heads (d_k = 8)
    D_FF = 64

    key = jax.random.PRNGKey(0)
    kx, kp = jax.random.split(key)
    x = jax.random.normal(kx, (B, S, D), jnp.float32)
    params = init_params(kp, D, D_FF)

    out = encoder_block(x, params, H)
    out = jax.block_until_ready(out)

    ref = encoder_block_ref(x, params, H)
    assert out.shape == (B, S, D)
    # bf16 matmul operands + approx EUP reciprocals vs an f32 reference.
    assert jnp.allclose(out, ref, atol=3e-2, rtol=3e-2), "mismatch vs reference"

    print("KERNEL_OK")
</pallas_src>

<mosaic_0001>
module attributes {stable_mosaic.version = 11 : i64} {
  func.func @encoder_block_kernel(%arg0: i32, %arg1: memref<2x8x32xf32, #tpu.memory_space<vmem>>, %arg2: memref<32x32xbf16, #tpu.memory_space<vmem>>, %arg3: memref<32x32xbf16, #tpu.memory_space<vmem>>, %arg4: memref<32x32xbf16, #tpu.memory_space<vmem>>, %arg5: memref<4x8x32xbf16, #tpu.memory_space<vmem>>, %arg6: memref<32x64xbf16, #tpu.memory_space<vmem>>, %arg7: memref<1x64xf32, #tpu.memory_space<vmem>>, %arg8: memref<64x64xbf16, #tpu.memory_space<vmem>>, %arg9: memref<1x64xf32, #tpu.memory_space<vmem>>, %arg10: memref<64x64xbf16, #tpu.memory_space<vmem>>, %arg11: memref<1x64xf32, #tpu.memory_space<vmem>>, %arg12: memref<64x64xbf16, #tpu.memory_space<vmem>>, %arg13: memref<1x64xf32, #tpu.memory_space<vmem>>, %arg14: memref<64x32xbf16, #tpu.memory_space<vmem>>, %arg15: memref<1x32xf32, #tpu.memory_space<vmem>>, %arg16: memref<1x32xf32, #tpu.memory_space<vmem>>, %arg17: memref<1x32xf32, #tpu.memory_space<vmem>>, %arg18: memref<1x32xf32, #tpu.memory_space<vmem>>, %arg19: memref<1x32xf32, #tpu.memory_space<vmem>>, %arg20: memref<2x8x32xf32, #tpu.memory_space<vmem>>) attributes {dimension_semantics = [#tpu.dimension_semantics<parallel>], iteration_bounds = array<i64: 1>, scalar_prefetch = 0 : i64, scratch_operands = 0 : i64, tpu.core_type = #tpu.core_type<tc>, window_params = [{transform_indices = @transform_0, window_bounds = array<i64: 2, 8, 32>}, {pipeline_mode = #tpu.pipeline_mode<synchronous>, transform_indices = @transform_1, window_bounds = array<i64: 32, 32>}, {pipeline_mode = #tpu.pipeline_mode<synchronous>, transform_indices = @transform_2, window_bounds = array<i64: 32, 32>}, {pipeline_mode = #tpu.pipeline_mode<synchronous>, transform_indices = @transform_3, window_bounds = array<i64: 32, 32>}, {pipeline_mode = #tpu.pipeline_mode<synchronous>, transform_indices = @transform_4, window_bounds = array<i64: 4, 8, 32>}, {pipeline_mode = #tpu.pipeline_mode<synchronous>, transform_indices = @transform_5, window_bounds = array<i64: 32, 64>}, {pipeline_mode = #tpu.pipeline_mode<synchronous>, transform_indices = @transform_6, window_bounds = array<i64: 1, 64>}, {pipeline_mode = #tpu.pipeline_mode<synchronous>, transform_indices = @transform_7, window_bounds = array<i64: 64, 64>}, {pipeline_mode = #tpu.pipeline_mode<synchronous>, transform_indices = @transform_8, window_bounds = array<i64: 1, 64>}, {pipeline_mode = #tpu.pipeline_mode<synchronous>, transform_indices = @transform_9, window_bounds = array<i64: 64, 64>}, {pipeline_mode = #tpu.pipeline_mode<synchronous>, transform_indices = @transform_10, window_bounds = array<i64: 1, 64>}, {pipeline_mode = #tpu.pipeline_mode<synchronous>, transform_indices = @transform_11, window_bounds = array<i64: 64, 64>}, {pipeline_mode = #tpu.pipeline_mode<synchronous>, transform_indices = @transform_12, window_bounds = array<i64: 1, 64>}, {pipeline_mode = #tpu.pipeline_mode<synchronous>, transform_indices = @transform_13, window_bounds = array<i64: 64, 32>}, {pipeline_mode = #tpu.pipeline_mode<synchronous>, transform_indices = @transform_14, window_bounds = array<i64: 1, 32>}, {pipeline_mode = #tpu.pipeline_mode<synchronous>, transform_indices = @transform_15, window_bounds = array<i64: 1, 32>}, {pipeline_mode = #tpu.pipeline_mode<synchronous>, transform_indices = @transform_16, window_bounds = array<i64: 1, 32>}, {pipeline_mode = #tpu.pipeline_mode<synchronous>, transform_indices = @transform_17, window_bounds = array<i64: 1, 32>}, {pipeline_mode = #tpu.pipeline_mode<synchronous>, transform_indices = @transform_18, window_bounds = array<i64: 1, 32>}, {transform_indices = @transform_19, window_bounds = array<i64: 2, 8, 32>}]} {
    %c0 = arith.constant 0 : index
    %c0_0 = arith.constant 0 : index
    %c0_1 = arith.constant 0 : index
    %0 = vector.load %arg1[%c0, %c0_0, %c0_1] : memref<2x8x32xf32, #tpu.memory_space<vmem>>, vector<2x8x32xf32>
    %1 = vector.shape_cast %0 : vector<2x8x32xf32> to vector<16x32xf32>
    %c0_2 = arith.constant 0 : index
    %c0_3 = arith.constant 0 : index
    %2 = vector.load %arg16[%c0_2, %c0_3] : memref<1x32xf32, #tpu.memory_space<vmem>>, vector<1x32xf32>
    %c0_4 = arith.constant 0 : index
    %c0_5 = arith.constant 0 : index
    %3 = vector.load %arg17[%c0_4, %c0_5] : memref<1x32xf32, #tpu.memory_space<vmem>>, vector<1x32xf32>
    %cst = arith.constant dense<0.000000e+00> : vector<16xf32>
    %4 = vector.multi_reduction <add>, %1, %cst [1] : vector<16x32xf32> to vector<16xf32>
    %5 = vector.shape_cast %4 : vector<16xf32> to vector<16x1xf32>
    %cst_6 = arith.constant 3.200000e+01 : f32
    %6 = vector.broadcast %cst_6 : f32 to vector<16x1xf32>
    %7 = arith.divf %5, %6 : vector<16x1xf32>
    %8 = vector.broadcast %7 : vector<16x1xf32> to vector<16x32xf32>
    %9 = arith.subf %1, %8 : vector<16x32xf32>
    %10 = arith.mulf %9, %9 : vector<16x32xf32>
    %cst_7 = arith.constant dense<0.000000e+00> : vector<16xf32>
    %11 = vector.multi_reduction <add>, %10, %cst_7 [1] : vector<16x32xf32> to vector<16xf32>
    %12 = vector.shape_cast %11 : vector<16xf32> to vector<16x1xf32>
    %cst_8 = arith.constant 0.0322580636 : f32
    %13 = vector.broadcast %cst_8 : f32 to vector<16x1xf32>
    %14 = arith.mulf %12, %13 : vector<16x1xf32>
    %15 = math.sqrt %14 : vector<16x1xf32>
    %cst_9 = arith.constant 9.99999997E-7 : f32
    %16 = vector.broadcast %cst_9 : f32 to vector<16x1xf32>
    %17 = arith.addf %15, %16 : vector<16x1xf32>
    %18 = tpu.reciprocal %17 {approx = true} : vector<16x1xf32> -> vector<16x1xf32>
    %19 = vector.broadcast %7 : vector<16x1xf32> to vector<16x32xf32>
    %20 = arith.subf %1, %19 : vector<16x32xf32>
    %21 = vector.broadcast %2 : vector<1x32xf32> to vector<16x32xf32>
    %22 = arith.mulf %21, %20 : vector<16x32xf32>
    %23 = vector.broadcast %18 : vector<16x1xf32> to vector<16x32xf32>
    %24 = arith.mulf %22, %23 : vector<16x32xf32>
    %25 = vector.broadcast %3 : vector<1x32xf32> to vector<16x32xf32>
    %26 = arith.addf %24, %25 : vector<16x32xf32>
    %27 = arith.truncf %26 : vector<16x32xf32> to vector<16x32xbf16>
    %c0_10 = arith.constant 0 : index
    %c0_11 = arith.constant 0 : index
    %28 = vector.load %arg2[%c0_10, %c0_11] : memref<32x32xbf16, #tpu.memory_space<vmem>>, vector<32x32xbf16>
    %cst_12 = arith.constant dense<0.000000e+00> : vector<16x32xf32>
    %29 = tpu.matmul %27, %28, %cst_12 {dimension_numbers = #tpu.dot_dimension_numbers<[1], [0], [0], [1], [0, 0, 1, 1], [], []>} : vector<16x32xbf16>, vector<32x32xbf16>, vector<16x32xf32> -> vector<16x32xf32>
    %c0_13 = arith.constant 0 : index
    %c0_14 = arith.constant 0 : index
    %30 = vector.load %arg3[%c0_13, %c0_14] : memref<32x32xbf16, #tpu.memory_space<vmem>>, vector<32x32xbf16>
    %cst_15 = arith.constant dense<0.000000e+00> : vector<16x32xf32>
    %31 = tpu.matmul %27, %30, %cst_15 {dimension_numbers = #tpu.dot_dimension_numbers<[1], [0], [0], [1], [0, 0, 1, 1], [], []>} : vector<16x32xbf16>, vector<32x32xbf16>, vector<16x32xf32> -> vector<16x32xf32>
    %c0_16 = arith.constant 0 : index
    %c0_17 = arith.constant 0 : index
    %32 = vector.load %arg4[%c0_16, %c0_17] : memref<32x32xbf16, #tpu.memory_space<vmem>>, vector<32x32xbf16>
    %cst_18 = arith.constant dense<0.000000e+00> : vector<16x32xf32>
    %33 = tpu.matmul %27, %32, %cst_18 {dimension_numbers = #tpu.dot_dimension_numbers<[1], [0], [0], [1], [0, 0, 1, 1], [], []>} : vector<16x32xbf16>, vector<32x32xbf16>, vector<16x32xf32> -> vector<16x32xf32>
    %cst_19 = arith.constant 0.353553385 : f32
    %34 = vector.broadcast %cst_19 : f32 to vector<16x32xf32>
    %35 = arith.mulf %29, %34 : vector<16x32xf32>
    %36 = vector.shape_cast %35 : vector<16x32xf32> to vector<2x8x32xf32>
    %37 = arith.truncf %36 : vector<2x8x32xf32> to vector<2x8x32xbf16>
    %38 = vector.shape_cast %31 : vector<16x32xf32> to vector<2x8x32xf32>
    %39 = arith.truncf %38 : vector<2x8x32xf32> to vector<2x8x32xbf16>
    %40 = vector.shape_cast %33 : vector<16x32xf32> to vector<2x8x32xf32>
    %41 = arith.truncf %40 : vector<2x8x32xf32> to vector<2x8x32xbf16>
    %cst_20 = arith.constant 0.000000e+00 : f32
    %42 = vector.broadcast %cst_20 : f32 to vector<16x32xf32>
    %43 = vector.extract_strided_slice %37 {offsets = [0, 0, 0], sizes = [2, 8, 8], strides = [1, 1, 1]} : vector<2x8x32xbf16> to vector<2x8x8xbf16>
    %44 = vector.extract_strided_slice %39 {offsets = [0, 0, 0], sizes = [2, 8, 8], strides = [1, 1, 1]} : vector<2x8x32xbf16> to vector<2x8x8xbf16>
    %45 = vector.extract_strided_slice %41 {offsets = [0, 0, 0], sizes = [2, 8, 8], strides = [1, 1, 1]} : vector<2x8x32xbf16> to vector<2x8x8xbf16>
    "tpu.trace_start"() <{level = 10 : i32, message = "bqd,bkd->bqk"}> : () -> ()
    %cst_21 = arith.constant dense<0.000000e+00> : vector<2x8x8xf32>
    %46 = tpu.matmul %43, %44, %cst_21 {dimension_numbers = #tpu.dot_dimension_numbers<[2], [2], [1], [1], [0, 0, 0, 1, 1, 1], [0], [0]>} : vector<2x8x8xbf16>, vector<2x8x8xbf16>, vector<2x8x8xf32> -> vector<2x8x8xf32>
    "tpu.trace_stop"() : () -> ()
    %cst_22 = arith.constant dense<0xFF800000> : vector<2x8xf32>
    %47 = vector.multi_reduction <maximumf>, %46, %cst_22 [2] : vector<2x8x8xf32> to vector<2x8xf32>
    %48 = vector.shape_cast %47 : vector<2x8xf32> to vector<2x8x1xf32>
    %49 = vector.broadcast %48 : vector<2x8x1xf32> to vector<2x8x8xf32>
    %50 = arith.subf %46, %49 : vector<2x8x8xf32>
    %51 = math.exp %50 : vector<2x8x8xf32>
    %cst_23 = arith.constant dense<0.000000e+00> : vector<2x8xf32>
    %52 = vector.multi_reduction <add>, %51, %cst_23 [2] : vector<2x8x8xf32> to vector<2x8xf32>
    %53 = vector.shape_cast %52 : vector<2x8xf32> to vector<2x8x1xf32>
    %54 = tpu.reciprocal %53 {approx = true} : vector<2x8x1xf32> -> vector<2x8x1xf32>
    %55 = vector.broadcast %54 : vector<2x8x1xf32> to vector<2x8x8xf32>
    %56 = arith.mulf %51, %55 : vector<2x8x8xf32>
    %57 = arith.truncf %56 : vector<2x8x8xf32> to vector<2x8x8xbf16>
    "tpu.trace_start"() <{level = 10 : i32, message = "bqk,bkd->bqd"}> : () -> ()
    %cst_24 = arith.constant dense<0.000000e+00> : vector<2x8x8xf32>
    %58 = tpu.matmul %57, %45, %cst_24 {dimension_numbers = #tpu.dot_dimension_numbers<[2], [1], [1], [2], [0, 0, 0, 1, 1, 2], [0], [0]>} : vector<2x8x8xbf16>, vector<2x8x8xbf16>, vector<2x8x8xf32> -> vector<2x8x8xf32>
    "tpu.trace_stop"() : () -> ()
    %59 = vector.shape_cast %58 : vector<2x8x8xf32> to vector<16x8xf32>
    %60 = arith.truncf %59 : vector<16x8xf32> to vector<16x8xbf16>
    %c0_25 = arith.constant 0 : index
    %c0_26 = arith.constant 0 : index
    %c0_27 = arith.constant 0 : index
    %61 = vector.load %arg5[%c0_25, %c0_26, %c0_27] : memref<4x8x32xbf16, #tpu.memory_space<vmem>>, vector<1x8x32xbf16>
    %62 = vector.shape_cast %61 : vector<1x8x32xbf16> to vector<8x32xbf16>
    %cst_28 = arith.constant dense<0.000000e+00> : vector<16x32xf32>
    %63 = tpu.matmul %60, %62, %cst_28 {dimension_numbers = #tpu.dot_dimension_numbers<[1], [0], [0], [1], [0, 0, 1, 1], [], []>} : vector<16x8xbf16>, vector<8x32xbf16>, vector<16x32xf32> -> vector<16x32xf32>
    %64 = arith.addf %42, %63 : vector<16x32xf32>
    %65 = vector.extract_strided_slice %37 {offsets = [0, 0, 8], sizes = [2, 8, 8], strides = [1, 1, 1]} : vector<2x8x32xbf16> to vector<2x8x8xbf16>
    %66 = vector.extract_strided_slice %39 {offsets = [0, 0, 8], sizes = [2, 8, 8], strides = [1, 1, 1]} : vector<2x8x32xbf16> to vector<2x8x8xbf16>
    %67 = vector.extract_strided_slice %41 {offsets = [0, 0, 8], sizes = [2, 8, 8], strides = [1, 1, 1]} : vector<2x8x32xbf16> to vector<2x8x8xbf16>
    "tpu.trace_start"() <{level = 10 : i32, message = "bqd,bkd->bqk"}> : () -> ()
    %cst_29 = arith.constant dense<0.000000e+00> : vector<2x8x8xf32>
    %68 = tpu.matmul %65, %66, %cst_29 {dimension_numbers = #tpu.dot_dimension_numbers<[2], [2], [1], [1], [0, 0, 0, 1, 1, 1], [0], [0]>} : vector<2x8x8xbf16>, vector<2x8x8xbf16>, vector<2x8x8xf32> -> vector<2x8x8xf32>
    "tpu.trace_stop"() : () -> ()
    %cst_30 = arith.constant dense<0xFF800000> : vector<2x8xf32>
    %69 = vector.multi_reduction <maximumf>, %68, %cst_30 [2] : vector<2x8x8xf32> to vector<2x8xf32>
    %70 = vector.shape_cast %69 : vector<2x8xf32> to vector<2x8x1xf32>
    %71 = vector.broadcast %70 : vector<2x8x1xf32> to vector<2x8x8xf32>
    %72 = arith.subf %68, %71 : vector<2x8x8xf32>
    %73 = math.exp %72 : vector<2x8x8xf32>
    %cst_31 = arith.constant dense<0.000000e+00> : vector<2x8xf32>
    %74 = vector.multi_reduction <add>, %73, %cst_31 [2] : vector<2x8x8xf32> to vector<2x8xf32>
    %75 = vector.shape_cast %74 : vector<2x8xf32> to vector<2x8x1xf32>
    %76 = tpu.reciprocal %75 {approx = true} : vector<2x8x1xf32> -> vector<2x8x1xf32>
    %77 = vector.broadcast %76 : vector<2x8x1xf32> to vector<2x8x8xf32>
    %78 = arith.mulf %73, %77 : vector<2x8x8xf32>
    %79 = arith.truncf %78 : vector<2x8x8xf32> to vector<2x8x8xbf16>
    "tpu.trace_start"() <{level = 10 : i32, message = "bqk,bkd->bqd"}> : () -> ()
    %cst_32 = arith.constant dense<0.000000e+00> : vector<2x8x8xf32>
    %80 = tpu.matmul %79, %67, %cst_32 {dimension_numbers = #tpu.dot_dimension_numbers<[2], [1], [1], [2], [0, 0, 0, 1, 1, 2], [0], [0]>} : vector<2x8x8xbf16>, vector<2x8x8xbf16>, vector<2x8x8xf32> -> vector<2x8x8xf32>
    "tpu.trace_stop"() : () -> ()
    %81 = vector.shape_cast %80 : vector<2x8x8xf32> to vector<16x8xf32>
    %82 = arith.truncf %81 : vector<16x8xf32> to vector<16x8xbf16>
    %c1 = arith.constant 1 : index
    %c0_33 = arith.constant 0 : index
    %c0_34 = arith.constant 0 : index
    %83 = vector.load %arg5[%c1, %c0_33, %c0_34] : memref<4x8x32xbf16, #tpu.memory_space<vmem>>, vector<1x8x32xbf16>
    %84 = vector.shape_cast %83 : vector<1x8x32xbf16> to vector<8x32xbf16>
    %cst_35 = arith.constant dense<0.000000e+00> : vector<16x32xf32>
    %85 = tpu.matmul %82, %84, %cst_35 {dimension_numbers = #tpu.dot_dimension_numbers<[1], [0], [0], [1], [0, 0, 1, 1], [], []>} : vector<16x8xbf16>, vector<8x32xbf16>, vector<16x32xf32> -> vector<16x32xf32>
    %86 = arith.addf %64, %85 : vector<16x32xf32>
    %87 = vector.extract_strided_slice %37 {offsets = [0, 0, 16], sizes = [2, 8, 8], strides = [1, 1, 1]} : vector<2x8x32xbf16> to vector<2x8x8xbf16>
    %88 = vector.extract_strided_slice %39 {offsets = [0, 0, 16], sizes = [2, 8, 8], strides = [1, 1, 1]} : vector<2x8x32xbf16> to vector<2x8x8xbf16>
    %89 = vector.extract_strided_slice %41 {offsets = [0, 0, 16], sizes = [2, 8, 8], strides = [1, 1, 1]} : vector<2x8x32xbf16> to vector<2x8x8xbf16>
    "tpu.trace_start"() <{level = 10 : i32, message = "bqd,bkd->bqk"}> : () -> ()
    %cst_36 = arith.constant dense<0.000000e+00> : vector<2x8x8xf32>
    %90 = tpu.matmul %87, %88, %cst_36 {dimension_numbers = #tpu.dot_dimension_numbers<[2], [2], [1], [1], [0, 0, 0, 1, 1, 1], [0], [0]>} : vector<2x8x8xbf16>, vector<2x8x8xbf16>, vector<2x8x8xf32> -> vector<2x8x8xf32>
    "tpu.trace_stop"() : () -> ()
    %cst_37 = arith.constant dense<0xFF800000> : vector<2x8xf32>
    %91 = vector.multi_reduction <maximumf>, %90, %cst_37 [2] : vector<2x8x8xf32> to vector<2x8xf32>
    %92 = vector.shape_cast %91 : vector<2x8xf32> to vector<2x8x1xf32>
    %93 = vector.broadcast %92 : vector<2x8x1xf32> to vector<2x8x8xf32>
    %94 = arith.subf %90, %93 : vector<2x8x8xf32>
    %95 = math.exp %94 : vector<2x8x8xf32>
    %cst_38 = arith.constant dense<0.000000e+00> : vector<2x8xf32>
    %96 = vector.multi_reduction <add>, %95, %cst_38 [2] : vector<2x8x8xf32> to vector<2x8xf32>
    %97 = vector.shape_cast %96 : vector<2x8xf32> to vector<2x8x1xf32>
    %98 = tpu.reciprocal %97 {approx = true} : vector<2x8x1xf32> -> vector<2x8x1xf32>
    %99 = vector.broadcast %98 : vector<2x8x1xf32> to vector<2x8x8xf32>
    %100 = arith.mulf %95, %99 : vector<2x8x8xf32>
    %101 = arith.truncf %100 : vector<2x8x8xf32> to vector<2x8x8xbf16>
    "tpu.trace_start"() <{level = 10 : i32, message = "bqk,bkd->bqd"}> : () -> ()
    %cst_39 = arith.constant dense<0.000000e+00> : vector<2x8x8xf32>
    %102 = tpu.matmul %101, %89, %cst_39 {dimension_numbers = #tpu.dot_dimension_numbers<[2], [1], [1], [2], [0, 0, 0, 1, 1, 2], [0], [0]>} : vector<2x8x8xbf16>, vector<2x8x8xbf16>, vector<2x8x8xf32> -> vector<2x8x8xf32>
    "tpu.trace_stop"() : () -> ()
    %103 = vector.shape_cast %102 : vector<2x8x8xf32> to vector<16x8xf32>
    %104 = arith.truncf %103 : vector<16x8xf32> to vector<16x8xbf16>
    %c2 = arith.constant 2 : index
    %c0_40 = arith.constant 0 : index
    %c0_41 = arith.constant 0 : index
    %105 = vector.load %arg5[%c2, %c0_40, %c0_41] : memref<4x8x32xbf16, #tpu.memory_space<vmem>>, vector<1x8x32xbf16>
    %106 = vector.shape_cast %105 : vector<1x8x32xbf16> to vector<8x32xbf16>
    %cst_42 = arith.constant dense<0.000000e+00> : vector<16x32xf32>
    %107 = tpu.matmul %104, %106, %cst_42 {dimension_numbers = #tpu.dot_dimension_numbers<[1], [0], [0], [1], [0, 0, 1, 1], [], []>} : vector<16x8xbf16>, vector<8x32xbf16>, vector<16x32xf32> -> vector<16x32xf32>
    %108 = arith.addf %86, %107 : vector<16x32xf32>
    %109 = vector.extract_strided_slice %37 {offsets = [0, 0, 24], sizes = [2, 8, 8], strides = [1, 1, 1]} : vector<2x8x32xbf16> to vector<2x8x8xbf16>
    %110 = vector.extract_strided_slice %39 {offsets = [0, 0, 24], sizes = [2, 8, 8], strides = [1, 1, 1]} : vector<2x8x32xbf16> to vector<2x8x8xbf16>
    %111 = vector.extract_strided_slice %41 {offsets = [0, 0, 24], sizes = [2, 8, 8], strides = [1, 1, 1]} : vector<2x8x32xbf16> to vector<2x8x8xbf16>
    "tpu.trace_start"() <{level = 10 : i32, message = "bqd,bkd->bqk"}> : () -> ()
    %cst_43 = arith.constant dense<0.000000e+00> : vector<2x8x8xf32>
    %112 = tpu.matmul %109, %110, %cst_43 {dimension_numbers = #tpu.dot_dimension_numbers<[2], [2], [1], [1], [0, 0, 0, 1, 1, 1], [0], [0]>} : vector<2x8x8xbf16>, vector<2x8x8xbf16>, vector<2x8x8xf32> -> vector<2x8x8xf32>
    "tpu.trace_stop"() : () -> ()
    %cst_44 = arith.constant dense<0xFF800000> : vector<2x8xf32>
    %113 = vector.multi_reduction <maximumf>, %112, %cst_44 [2] : vector<2x8x8xf32> to vector<2x8xf32>
    %114 = vector.shape_cast %113 : vector<2x8xf32> to vector<2x8x1xf32>
    %115 = vector.broadcast %114 : vector<2x8x1xf32> to vector<2x8x8xf32>
    %116 = arith.subf %112, %115 : vector<2x8x8xf32>
    %117 = math.exp %116 : vector<2x8x8xf32>
    %cst_45 = arith.constant dense<0.000000e+00> : vector<2x8xf32>
    %118 = vector.multi_reduction <add>, %117, %cst_45 [2] : vector<2x8x8xf32> to vector<2x8xf32>
    %119 = vector.shape_cast %118 : vector<2x8xf32> to vector<2x8x1xf32>
    %120 = tpu.reciprocal %119 {approx = true} : vector<2x8x1xf32> -> vector<2x8x1xf32>
    %121 = vector.broadcast %120 : vector<2x8x1xf32> to vector<2x8x8xf32>
    %122 = arith.mulf %117, %121 : vector<2x8x8xf32>
    %123 = arith.truncf %122 : vector<2x8x8xf32> to vector<2x8x8xbf16>
    "tpu.trace_start"() <{level = 10 : i32, message = "bqk,bkd->bqd"}> : () -> ()
    %cst_46 = arith.constant dense<0.000000e+00> : vector<2x8x8xf32>
    %124 = tpu.matmul %123, %111, %cst_46 {dimension_numbers = #tpu.dot_dimension_numbers<[2], [1], [1], [2], [0, 0, 0, 1, 1, 2], [0], [0]>} : vector<2x8x8xbf16>, vector<2x8x8xbf16>, vector<2x8x8xf32> -> vector<2x8x8xf32>
    "tpu.trace_stop"() : () -> ()
    %125 = vector.shape_cast %124 : vector<2x8x8xf32> to vector<16x8xf32>
    %126 = arith.truncf %125 : vector<16x8xf32> to vector<16x8xbf16>
    %c3 = arith.constant 3 : index
    %c0_47 = arith.constant 0 : index
    %c0_48 = arith.constant 0 : index
    %127 = vector.load %arg5[%c3, %c0_47, %c0_48] : memref<4x8x32xbf16, #tpu.memory_space<vmem>>, vector<1x8x32xbf16>
    %128 = vector.shape_cast %127 : vector<1x8x32xbf16> to vector<8x32xbf16>
    %cst_49 = arith.constant dense<0.000000e+00> : vector<16x32xf32>
    %129 = tpu.matmul %126, %128, %cst_49 {dimension_numbers = #tpu.dot_dimension_numbers<[1], [0], [0], [1], [0, 0, 1, 1], [], []>} : vector<16x8xbf16>, vector<8x32xbf16>, vector<16x32xf32> -> vector<16x32xf32>
    %130 = arith.addf %108, %129 : vector<16x32xf32>
    %131 = arith.addf %1, %130 : vector<16x32xf32>
    %c0_50 = arith.constant 0 : index
    %c0_51 = arith.constant 0 : index
    %132 = vector.load %arg18[%c0_50, %c0_51] : memref<1x32xf32, #tpu.memory_space<vmem>>, vector<1x32xf32>
    %c0_52 = arith.constant 0 : index
    %c0_53 = arith.constant 0 : index
    %133 = vector.load %arg19[%c0_52, %c0_53] : memref<1x32xf32, #tpu.memory_space<vmem>>, vector<1x32xf32>
    %cst_54 = arith.constant dense<0.000000e+00> : vector<16xf32>
    %134 = vector.multi_reduction <add>, %131, %cst_54 [1] : vector<16x32xf32> to vector<16xf32>
    %135 = vector.shape_cast %134 : vector<16xf32> to vector<16x1xf32>
    %cst_55 = arith.constant 3.200000e+01 : f32
    %136 = vector.broadcast %cst_55 : f32 to vector<16x1xf32>
    %137 = arith.divf %135, %136 : vector<16x1xf32>
    %138 = vector.broadcast %137 : vector<16x1xf32> to vector<16x32xf32>
    %139 = arith.subf %131, %138 : vector<16x32xf32>
    %140 = arith.mulf %139, %139 : vector<16x32xf32>
    %cst_56 = arith.constant dense<0.000000e+00> : vector<16xf32>
    %141 = vector.multi_reduction <add>, %140, %cst_56 [1] : vector<16x32xf32> to vector<16xf32>
    %142 = vector.shape_cast %141 : vector<16xf32> to vector<16x1xf32>
    %cst_57 = arith.constant 0.0322580636 : f32
    %143 = vector.broadcast %cst_57 : f32 to vector<16x1xf32>
    %144 = arith.mulf %142, %143 : vector<16x1xf32>
    %145 = math.sqrt %144 : vector<16x1xf32>
    %cst_58 = arith.constant 9.99999997E-7 : f32
    %146 = vector.broadcast %cst_58 : f32 to vector<16x1xf32>
    %147 = arith.addf %145, %146 : vector<16x1xf32>
    %148 = tpu.reciprocal %147 {approx = true} : vector<16x1xf32> -> vector<16x1xf32>
    %149 = vector.broadcast %137 : vector<16x1xf32> to vector<16x32xf32>
    %150 = arith.subf %131, %149 : vector<16x32xf32>
    %151 = vector.broadcast %132 : vector<1x32xf32> to vector<16x32xf32>
    %152 = arith.mulf %151, %150 : vector<16x32xf32>
    %153 = vector.broadcast %148 : vector<16x1xf32> to vector<16x32xf32>
    %154 = arith.mulf %152, %153 : vector<16x32xf32>
    %155 = vector.broadcast %133 : vector<1x32xf32> to vector<16x32xf32>
    %156 = arith.addf %154, %155 : vector<16x32xf32>
    %157 = arith.truncf %156 : vector<16x32xf32> to vector<16x32xbf16>
    %c0_59 = arith.constant 0 : index
    %c0_60 = arith.constant 0 : index
    %158 = vector.load %arg6[%c0_59, %c0_60] : memref<32x64xbf16, #tpu.memory_space<vmem>>, vector<32x64xbf16>
    %cst_61 = arith.constant dense<0.000000e+00> : vector<16x64xf32>
    %159 = tpu.matmul %157, %158, %cst_61 {dimension_numbers = #tpu.dot_dimension_numbers<[1], [0], [0], [1], [0, 0, 1, 1], [], []>} : vector<16x32xbf16>, vector<32x64xbf16>, vector<16x64xf32> -> vector<16x64xf32>
    %c0_62 = arith.constant 0 : index
    %c0_63 = arith.constant 0 : index
    %160 = vector.load %arg7[%c0_62, %c0_63] : memref<1x64xf32, #tpu.memory_space<vmem>>, vector<1x64xf32>
    %161 = vector.broadcast %160 : vector<1x64xf32> to vector<16x64xf32>
    %162 = arith.addf %159, %161 : vector<16x64xf32>
    %cst_64 = arith.constant 0.000000e+00 : f32
    %163 = vector.broadcast %cst_64 : f32 to vector<16x64xf32>
    %164 = arith.maximumf %162, %163 : vector<16x64xf32>
    %165 = arith.truncf %164 : vector<16x64xf32> to vector<16x64xbf16>
    %c0_65 = arith.constant 0 : index
    %c0_66 = arith.constant 0 : index
    %166 = vector.load %arg8[%c0_65, %c0_66] : memref<64x64xbf16, #tpu.memory_space<vmem>>, vector<64x64xbf16>
    %cst_67 = arith.constant dense<0.000000e+00> : vector<16x64xf32>
    %167 = tpu.matmul %165, %166, %cst_67 {dimension_numbers = #tpu.dot_dimension_numbers<[1], [0], [0], [1], [0, 0, 1, 1], [], []>} : vector<16x64xbf16>, vector<64x64xbf16>, vector<16x64xf32> -> vector<16x64xf32>
    %c0_68 = arith.constant 0 : index
    %c0_69 = arith.constant 0 : index
    %168 = vector.load %arg9[%c0_68, %c0_69] : memref<1x64xf32, #tpu.memory_space<vmem>>, vector<1x64xf32>
    %169 = vector.broadcast %168 : vector<1x64xf32> to vector<16x64xf32>
    %170 = arith.addf %167, %169 : vector<16x64xf32>
    %cst_70 = arith.constant 0.000000e+00 : f32
    %171 = vector.broadcast %cst_70 : f32 to vector<16x64xf32>
    %172 = arith.maximumf %170, %171 : vector<16x64xf32>
    %173 = arith.truncf %172 : vector<16x64xf32> to vector<16x64xbf16>
    %c0_71 = arith.constant 0 : index
    %c0_72 = arith.constant 0 : index
    %174 = vector.load %arg10[%c0_71, %c0_72] : memref<64x64xbf16, #tpu.memory_space<vmem>>, vector<64x64xbf16>
    %cst_73 = arith.constant dense<0.000000e+00> : vector<16x64xf32>
    %175 = tpu.matmul %173, %174, %cst_73 {dimension_numbers = #tpu.dot_dimension_numbers<[1], [0], [0], [1], [0, 0, 1, 1], [], []>} : vector<16x64xbf16>, vector<64x64xbf16>, vector<16x64xf32> -> vector<16x64xf32>
    %c0_74 = arith.constant 0 : index
    %c0_75 = arith.constant 0 : index
    %176 = vector.load %arg11[%c0_74, %c0_75] : memref<1x64xf32, #tpu.memory_space<vmem>>, vector<1x64xf32>
    %177 = vector.broadcast %176 : vector<1x64xf32> to vector<16x64xf32>
    %178 = arith.addf %175, %177 : vector<16x64xf32>
    %cst_76 = arith.constant 0.000000e+00 : f32
    %179 = vector.broadcast %cst_76 : f32 to vector<16x64xf32>
    %180 = arith.maximumf %178, %179 : vector<16x64xf32>
    %181 = arith.truncf %180 : vector<16x64xf32> to vector<16x64xbf16>
    %c0_77 = arith.constant 0 : index
    %c0_78 = arith.constant 0 : index
    %182 = vector.load %arg12[%c0_77, %c0_78] : memref<64x64xbf16, #tpu.memory_space<vmem>>, vector<64x64xbf16>
    %cst_79 = arith.constant dense<0.000000e+00> : vector<16x64xf32>
    %183 = tpu.matmul %181, %182, %cst_79 {dimension_numbers = #tpu.dot_dimension_numbers<[1], [0], [0], [1], [0, 0, 1, 1], [], []>} : vector<16x64xbf16>, vector<64x64xbf16>, vector<16x64xf32> -> vector<16x64xf32>
    %c0_80 = arith.constant 0 : index
    %c0_81 = arith.constant 0 : index
    %184 = vector.load %arg13[%c0_80, %c0_81] : memref<1x64xf32, #tpu.memory_space<vmem>>, vector<1x64xf32>
    %185 = vector.broadcast %184 : vector<1x64xf32> to vector<16x64xf32>
    %186 = arith.addf %183, %185 : vector<16x64xf32>
    %cst_82 = arith.constant 0.000000e+00 : f32
    %187 = vector.broadcast %cst_82 : f32 to vector<16x64xf32>
    %188 = arith.maximumf %186, %187 : vector<16x64xf32>
    %189 = arith.truncf %188 : vector<16x64xf32> to vector<16x64xbf16>
    %c0_83 = arith.constant 0 : index
    %c0_84 = arith.constant 0 : index
    %190 = vector.load %arg14[%c0_83, %c0_84] : memref<64x32xbf16, #tpu.memory_space<vmem>>, vector<64x32xbf16>
    %cst_85 = arith.constant dense<0.000000e+00> : vector<16x32xf32>
    %191 = tpu.matmul %189, %190, %cst_85 {dimension_numbers = #tpu.dot_dimension_numbers<[1], [0], [0], [1], [0, 0, 1, 1], [], []>} : vector<16x64xbf16>, vector<64x32xbf16>, vector<16x32xf32> -> vector<16x32xf32>
    %c0_86 = arith.constant 0 : index
    %c0_87 = arith.constant 0 : index
    %192 = vector.load %arg15[%c0_86, %c0_87] : memref<1x32xf32, #tpu.memory_space<vmem>>, vector<1x32xf32>
    %193 = vector.broadcast %192 : vector<1x32xf32> to vector<16x32xf32>
    %194 = arith.addf %191, %193 : vector<16x32xf32>
    %195 = arith.addf %131, %194 : vector<16x32xf32>
    %196 = vector.shape_cast %195 : vector<16x32xf32> to vector<2x8x32xf32>
    %c0_88 = arith.constant 0 : index
    %c0_89 = arith.constant 0 : index
    %c0_90 = arith.constant 0 : index
    %197 = vector.load %arg20[%c0_88, %c0_89, %c0_90] : memref<2x8x32xf32, #tpu.memory_space<vmem>>, vector<2x8x32xf32>
    tpu.vector_store %arg20[%c0_88, %c0_89, %c0_90], %196 {strides = array<i32>} : memref<2x8x32xf32, #tpu.memory_space<vmem>>, vector<2x8x32xf32>,
    return
  }
  func.func @transform_0(%arg0: i32) -> (i32, i32, i32) {
    %c0_i32 = arith.constant 0 : i32
    %c0_i32_0 = arith.constant 0 : i32
    %c0_i32_1 = arith.constant 0 : i32
    return %arg0, %c0_i32, %c0_i32_0 : i32, i32, i32
  }
  func.func @transform_1(%arg0: i32) -> (i32, i32) {
    %c0_i32 = arith.constant 0 : i32
    %c0_i32_0 = arith.constant 0 : i32
    %c0_i32_1 = arith.constant 0 : i32
    return %c0_i32, %c0_i32_0 : i32, i32
  }
  func.func @transform_2(%arg0: i32) -> (i32, i32) {
    %c0_i32 = arith.constant 0 : i32
    %c0_i32_0 = arith.constant 0 : i32
    %c0_i32_1 = arith.constant 0 : i32
    return %c0_i32, %c0_i32_0 : i32, i32
  }
  func.func @transform_3(%arg0: i32) -> (i32, i32) {
    %c0_i32 = arith.constant 0 : i32
    %c0_i32_0 = arith.constant 0 : i32
    %c0_i32_1 = arith.constant 0 : i32
    return %c0_i32, %c0_i32_0 : i32, i32
  }
  func.func @transform_4(%arg0: i32) -> (i32, i32, i32) {
    %c0_i32 = arith.constant 0 : i32
    %c0_i32_0 = arith.constant 0 : i32
    %c0_i32_1 = arith.constant 0 : i32
    %c0_i32_2 = arith.constant 0 : i32
    return %c0_i32, %c0_i32_0, %c0_i32_1 : i32, i32, i32
  }
  func.func @transform_5(%arg0: i32) -> (i32, i32) {
    %c0_i32 = arith.constant 0 : i32
    %c0_i32_0 = arith.constant 0 : i32
    %c0_i32_1 = arith.constant 0 : i32
    return %c0_i32, %c0_i32_0 : i32, i32
  }
  func.func @transform_6(%arg0: i32) -> (i32, i32) {
    %c0_i32 = arith.constant 0 : i32
    %c0_i32_0 = arith.constant 0 : i32
    %c0_i32_1 = arith.constant 0 : i32
    return %c0_i32, %c0_i32_0 : i32, i32
  }
  func.func @transform_7(%arg0: i32) -> (i32, i32) {
    %c0_i32 = arith.constant 0 : i32
    %c0_i32_0 = arith.constant 0 : i32
    %c0_i32_1 = arith.constant 0 : i32
    return %c0_i32, %c0_i32_0 : i32, i32
  }
  func.func @transform_8(%arg0: i32) -> (i32, i32) {
    %c0_i32 = arith.constant 0 : i32
    %c0_i32_0 = arith.constant 0 : i32
    %c0_i32_1 = arith.constant 0 : i32
    return %c0_i32, %c0_i32_0 : i32, i32
  }
  func.func @transform_9(%arg0: i32) -> (i32, i32) {
    %c0_i32 = arith.constant 0 : i32
    %c0_i32_0 = arith.constant 0 : i32
    %c0_i32_1 = arith.constant 0 : i32
    return %c0_i32, %c0_i32_0 : i32, i32
  }
  func.func @transform_10(%arg0: i32) -> (i32, i32) {
    %c0_i32 = arith.constant 0 : i32
    %c0_i32_0 = arith.constant 0 : i32
    %c0_i32_1 = arith.constant 0 : i32
    return %c0_i32, %c0_i32_0 : i32, i32
  }
  func.func @transform_11(%arg0: i32) -> (i32, i32) {
    %c0_i32 = arith.constant 0 : i32
    %c0_i32_0 = arith.constant 0 : i32
    %c0_i32_1 = arith.constant 0 : i32
    return %c0_i32, %c0_i32_0 : i32, i32
  }
  func.func @transform_12(%arg0: i32) -> (i32, i32) {
    %c0_i32 = arith.constant 0 : i32
    %c0_i32_0 = arith.constant 0 : i32
    %c0_i32_1 = arith.constant 0 : i32
    return %c0_i32, %c0_i32_0 : i32, i32
  }
  func.func @transform_13(%arg0: i32) -> (i32, i32) {
    %c0_i32 = arith.constant 0 : i32
    %c0_i32_0 = arith.constant 0 : i32
    %c0_i32_1 = arith.constant 0 : i32
    return %c0_i32, %c0_i32_0 : i32, i32
  }
  func.func @transform_14(%arg0: i32) -> (i32, i32) {
    %c0_i32 = arith.constant 0 : i32
    %c0_i32_0 = arith.constant 0 : i32
    %c0_i32_1 = arith.constant 0 : i32
    return %c0_i32, %c0_i32_0 : i32, i32
  }
  func.func @transform_15(%arg0: i32) -> (i32, i32) {
    %c0_i32 = arith.constant 0 : i32
    %c0_i32_0 = arith.constant 0 : i32
    %c0_i32_1 = arith.constant 0 : i32
    return %c0_i32, %c0_i32_0 : i32, i32
  }
  func.func @transform_16(%arg0: i32) -> (i32, i32) {
    %c0_i32 = arith.constant 0 : i32
    %c0_i32_0 = arith.constant 0 : i32
    %c0_i32_1 = arith.constant 0 : i32
    return %c0_i32, %c0_i32_0 : i32, i32
  }
  func.func @transform_17(%arg0: i32) -> (i32, i32) {
    %c0_i32 = arith.constant 0 : i32
    %c0_i32_0 = arith.constant 0 : i32
    %c0_i32_1 = arith.constant 0 : i32
    return %c0_i32, %c0_i32_0 : i32, i32
  }
  func.func @transform_18(%arg0: i32) -> (i32, i32) {
    %c0_i32 = arith.constant 0 : i32
    %c0_i32_0 = arith.constant 0 : i32
    %c0_i32_1 = arith.constant 0 : i32
    return %c0_i32, %c0_i32_0 : i32, i32
  }
  func.func @transform_19(%arg0: i32) -> (i32, i32, i32) {
    %c0_i32 = arith.constant 0 : i32
    %c0_i32_0 = arith.constant 0 : i32
    %c0_i32_1 = arith.constant 0 : i32
    return %arg0, %c0_i32, %c0_i32_0 : i32, i32, i32
  }
}

</mosaic_0001>

<llo_original>
// kernel: tpu_custom_call.1
$region0: #{tpu_custom_call.1}
  #allocation0 [shape = 'u32[]', space=smem, size = 0x4, offset = 0x4, fixed_abs, tag = 'smem constant byte address 0x4 - core index']
  #allocation1 [shape = 'u32[144,128]{1,0:T(1,128)}', space=vmem, size = 0x12000, scoped, tag = 'internal scratch']
  %s0 = inlined_call_operand.hbm [shape: f32[2,8,32], index: 0, kind: input, shape index: {}]
  %s1 = inlined_call_operand.hbm [shape: bf16[32,32], index: 1, kind: input, shape index: {}]
  %s2 = inlined_call_operand.hbm [shape: bf16[32,32], index: 2, kind: input, shape index: {}]
  %s3 = inlined_call_operand.hbm [shape: bf16[32,32], index: 3, kind: input, shape index: {}]
  %s4 = inlined_call_operand.hbm [shape: bf16[4,8,32], index: 4, kind: input, shape index: {}]
  %s5 = inlined_call_operand.hbm [shape: bf16[32,64], index: 5, kind: input, shape index: {}]
  %s6 = inlined_call_operand.hbm [shape: f32[1,64], index: 6, kind: input, shape index: {}]
  %s7 = inlined_call_operand.vmem [shape: bf16[64,64], index: 7, kind: input, shape index: {}]
  %s8 = inlined_call_operand.hbm [shape: f32[1,64], index: 8, kind: input, shape index: {}]
  %s9 = inlined_call_operand.vmem [shape: bf16[64,64], index: 9, kind: input, shape index: {}]
  %s10 = inlined_call_operand.vmem [shape: f32[1,64], index: 10, kind: input, shape index: {}]
  %s11 = inlined_call_operand.hbm [shape: bf16[64,64], index: 11, kind: input, shape index: {}]
  %s12 = inlined_call_operand.vmem [shape: f32[1,64], index: 12, kind: input, shape index: {}]
  %s13 = inlined_call_operand.vmem [shape: bf16[64,32], index: 13, kind: input, shape index: {}]
  %s14 = inlined_call_operand.vmem [shape: f32[1,32], index: 14, kind: input, shape index: {}]
  %s15 = inlined_call_operand.vmem [shape: f32[1,32], index: 15, kind: input, shape index: {}]
  %s16 = inlined_call_operand.vmem [shape: f32[1,32], index: 16, kind: input, shape index: {}]
  %s17 = inlined_call_operand.vmem [shape: f32[1,32], index: 17, kind: input, shape index: {}]
  %s18 = inlined_call_operand.vmem [shape: f32[1,32], index: 18, kind: input, shape index: {}]
  %s19 = inlined_call_operand.hbm [shape: f32[2,8,32], index: 19, kind: output, shape index: {}]
  %s20 = sld [smem:[#allocation0]]
  $region122: #{tpu_custom_call.1} parent=0
    _
  %s22 = ssub.s32 1, %s20
  %s23 = scalar_select 0, %s22, %s20
  $region1: #{tpu_custom_call.1} parent=0
    #allocation2 [shape = 'u8[8192]{0}', space=vmem, size = 0x2000, scoped, tag = 'input window, operand 0, single buffered']
    #allocation3 [shape = 's32[1]{0}', space=sflag, size = 0x4, scoped, tag = 'scoped memory for tpu_custom_call.1']
    #allocation4 [shape = 's32[1]{0}', space=sflag, size = 0x4, scoped, tag = 'scoped memory for tpu_custom_call.1']
    #allocation5 [shape = 'u8[8192]{0}', space=vmem, size = 0x2000, scoped, tag = 'input window, operand 1, single buffered']
    #allocation6 [shape = 's32[1]{0}', space=sflag, size = 0x4, scoped, tag = 'scoped memory for tpu_custom_call.1']
    #allocation7 [shape = 'u8[8192]{0}', space=vmem, size = 0x2000, scoped, tag = 'input window, operand 2, single buffered']
    #allocation8 [shape = 'u8[8192]{0}', space=vmem, size = 0x2000, scoped, tag = 'input window, operand 3, single buffered']
    #allocation9 [shape = 's32[1]{0}', space=sflag, size = 0x4, scoped, tag = 'scoped memory for tpu_custom_call.1']
    #allocation10 [shape = 'u8[8192]{0}', space=vmem, size = 0x2000, scoped, tag = 'input window, operand 4, single buffered']
    #allocation11 [shape = 'u8[8192]{0}', space=vmem, size = 0x2000, scoped, tag = 'input window, operand 5, single buffered']
    #allocation12 [shape = 's32[1]{0}', space=sflag, size = 0x4, scoped, tag = 'scoped memory for tpu_custom_call.1']
    #allocation13 [shape = 'u8[512]{0}', space=vmem, size = 0x400, scoped, tag = 'input window, operand 6, single buffered']
    #allocation14 [shape = 'u8[512]{0}', space=vmem, size = 0x400, scoped, tag = 'input window, operand 8, single buffered']
    #allocation15 [shape = 's32[1]{0}', space=sflag, size = 0x4, scoped, tag = 'scoped memory for tpu_custom_call.1']
    #allocation16 [shape = 'u8[16384]{0}', space=vmem, size = 0x4000, scoped, tag = 'input window, operand 11, single buffered']
    #allocation17 [shape = 'u8[8192]{0}', space=vmem, size = 0x2000, scoped, tag = 'output window, operand 0, single buffered']
    %24 = vsyncpa [#allocation3], 0
    %25 = vsyncpa [#allocation6], 0
    %26 = vsyncpa [#allocation9], 0
    %27 = vsyncpa [#allocation12], 0
    %28 = vsyncpa [#allocation15], 0
    %29 = vsyncpa [#allocation4], 0
    // Predicated region
    $region2: #{tpu_custom_call.1} parent=1 // pred_check
      _
    $region3: #{tpu_custom_call.1} parent=1 // pred_check_branch
      %31 = sbr.rel (0) target = $region5
    $region4: #{tpu_custom_call.1} parent=1 // pred_region
      %s33 = ssub.s32 256, 256
      %34 = vsyncadd [#allocation3], %s33
      %s35 = sshll.u32 [#allocation2], 4
      %s36 = int_to_ptr.vmem [resolvable:$true] %s35
      %41 = dma.hbm_to_vmem [thread:$0]  %s0, 256, %s36, [#allocation3], 128, 128, 8
    $region5: #{tpu_custom_call.1} parent=1 // pred_fallthru
      _
    // Predicated region
    $region6: #{tpu_custom_call.1} parent=1 // pred_check
      _
    $region7: #{tpu_custom_call.1} parent=1 // pred_check_branch
      %43 = sbr.rel (0) target = $region9
    $region8: #{tpu_custom_call.1} parent=1 // pred_region
      %s45 = ssub.s32 256, 256
      %46 = vsyncadd [#allocation6], %s45
      %s47 = sshll.u32 [#allocation5], 4
      %s48 = int_to_ptr.vmem [resolvable:$true] %s47
      %53 = dma.hbm_to_vmem [thread:$0]  %s1, 256, %s48, [#allocation6], 64, 64, 4
    $region9: #{tpu_custom_call.1} parent=1 // pred_fallthru
      _
    // Predicated region
    $region10: #{tpu_custom_call.1} parent=1 // pred_check
      _
    $region11: #{tpu_custom_call.1} parent=1 // pred_check_branch
      %55 = sbr.rel (0) target = $region13
    $region12: #{tpu_custom_call.1} parent=1 // pred_region
      %s57 = ssub.s32 256, 256
      %58 = vsyncadd [#allocation6], %s57
      %s59 = sshll.u32 [#allocation7], 4
      %s60 = int_to_ptr.vmem [resolvable:$true] %s59
      %65 = dma.hbm_to_vmem [thread:$0]  %s2, 256, %s60, [#allocation6], 64, 64, 4
    $region13: #{tpu_custom_call.1} parent=1 // pred_fallthru
      _
    // Predicated region
    $region14: #{tpu_custom_call.1} parent=1 // pred_check
      _
    $region15: #{tpu_custom_call.1} parent=1 // pred_check_branch
      %67 = sbr.rel (0) target = $region17
    $region16: #{tpu_custom_call.1} parent=1 // pred_region
      %s69 = ssub.s32 256, 256
      %70 = vsyncadd [#allocation9], %s69
      %s71 = sshll.u32 [#allocation8], 4
      %s72 = int_to_ptr.vmem [resolvable:$true] %s71
      %77 = dma.hbm_to_vmem [thread:$0]  %s3, 256, %s72, [#allocation9], 64, 64, 4
    $region17: #{tpu_custom_call.1} parent=1 // pred_fallthru
      _
    // Predicated region
    $region18: #{tpu_custom_call.1} parent=1 // pred_check
      _
    $region19: #{tpu_custom_call.1} parent=1 // pred_check_branch
      %79 = sbr.rel (0) target = $region21
    $region20: #{tpu_custom_call.1} parent=1 // pred_region
      %s81 = ssub.s32 256, 256
      %82 = vsyncadd [#allocation9], %s81
      %s83 = sshll.u32 [#allocation10], 4
      %s84 = int_to_ptr.vmem [resolvable:$true] %s83
      %89 = dma.hbm_to_vmem [thread:$0]  %s4, 256, %s84, [#allocation9], 64, 64, 4
    $region21: #{tpu_custom_call.1} parent=1 // pred_fallthru
      _
    // Predicated region
    $region22: #{tpu_custom_call.1} parent=1 // pred_check
      _
    $region23: #{tpu_custom_call.1} parent=1 // pred_check_branch
      %91 = sbr.rel (0) target = $region25
    $region24: #{tpu_custom_call.1} parent=1 // pred_region
      %s93 = ssub.s32 256, 256
      %94 = vsyncadd [#allocation12], %s93
      %s95 = sshll.u32 [#allocation11], 4
      %s96 = int_to_ptr.vmem [resolvable:$true] %s95
      %101 = dma.hbm_to_vmem [thread:$0]  %s5, 256, %s96, [#allocation12], 64, 64, 4
    $region25: #{tpu_custom_call.1} parent=1 // pred_fallthru
      _
    // Predicated region
    $region26: #{tpu_custom_call.1} parent=1 // pred_check
      _
    $region27: #{tpu_custom_call.1} parent=1 // pred_check_branch
      %103 = sbr.rel (0) target = $region29
    $region28: #{tpu_custom_call.1} parent=1 // pred_region
      %s105 = ssub.s32 16, 16
      %106 = vsyncadd [#allocation12], %s105
      %s108 = sshll.u32 [#allocation13], 4
      %s109 = int_to_ptr.vmem [resolvable:$true] %s108
      %111 = dma.hbm_to_vmem [thread:$0]  %s6, 16, %s109, [#allocation12]
    $region29: #{tpu_custom_call.1} parent=1 // pred_fallthru
      _
    // Predicated region
    $region30: #{tpu_custom_call.1} parent=1 // pred_check
      _
    $region31: #{tpu_custom_call.1} parent=1 // pred_check_branch
      %113 = sbr.rel (0) target = $region33
    $region32: #{tpu_custom_call.1} parent=1 // pred_region
      _
    $region33: #{tpu_custom_call.1} parent=1 // pred_fallthru
      _
    // Predicated region
    $region34: #{tpu_custom_call.1} parent=1 // pred_check
      _
    $region35: #{tpu_custom_call.1} parent=1 // pred_check_branch
      %115 = sbr.rel (0) target = $region37
    $region36: #{tpu_custom_call.1} parent=1 // pred_region
      %s117 = ssub.s32 16, 16
      %118 = vsyncadd [#allocation15], %s117
      %s120 = sshll.u32 [#allocation14], 4
      %s121 = int_to_ptr.vmem [resolvable:$true] %s120
      %123 = dma.hbm_to_vmem [thread:$0]  %s8, 16, %s121, [#allocation15]
    $region37: #{tpu_custom_call.1} parent=1 // pred_fallthru
      _
    // Predicated region
    $region38: #{tpu_custom_call.1} parent=1 // pred_check
      _
    $region39: #{tpu_custom_call.1} parent=1 // pred_check_branch
      %125 = sbr.rel (0) target = $region41
    $region40: #{tpu_custom_call.1} parent=1 // pred_region
      _
    $region41: #{tpu_custom_call.1} parent=1 // pred_fallthru
      _
    // Predicated region
    $region42: #{tpu_custom_call.1} parent=1 // pred_check
      _
    $region43: #{tpu_custom_call.1} parent=1 // pred_check_branch
      %127 = sbr.rel (0) target = $region45
    $region44: #{tpu_custom_call.1} parent=1 // pred_region
      _
    $region45: #{tpu_custom_call.1} parent=1 // pred_fallthru
      _
    // Predicated region
    $region46: #{tpu_custom_call.1} parent=1 // pred_check
      _
    $region47: #{tpu_custom_call.1} parent=1 // pred_check_branch
      %129 = sbr.rel (0) target = $region49
    $region48: #{tpu_custom_call.1} parent=1 // pred_region
      %s131 = ssub.s32 512, 512
      %132 = vsyncadd [#allocation15], %s131
      %s133 = sshll.u32 [#allocation16], 4
      %s134 = int_to_ptr.vmem [resolvable:$true] %s133
      %139 = dma.hbm_to_vmem [thread:$0]  %s11, 512, %s134, [#allocation15], 64, 64, 4
    $region49: #{tpu_custom_call.1} parent=1 // pred_fallthru
      _
    // Predicated region
    $region50: #{tpu_custom_call.1} parent=1 // pred_check
      _
    $region51: #{tpu_custom_call.1} parent=1 // pred_check_branch
      %141 = sbr.rel (0) target = $region53
    $region52: #{tpu_custom_call.1} parent=1 // pred_region
      _
    $region53: #{tpu_custom_call.1} parent=1 // pred_fallthru
      _
    // Predicated region
    $region54: #{tpu_custom_call.1} parent=1 // pred_check
      _
    $region55: #{tpu_custom_call.1} parent=1 // pred_check_branch
      %143 = sbr.rel (0) target = $region57
    $region56: #{tpu_custom_call.1} parent=1 // pred_region
      _
    $region57: #{tpu_custom_call.1} parent=1 // pred_fallthru
      _
    // Predicated region
    $region58: #{tpu_custom_call.1} parent=1 // pred_check
      _
    $region59: #{tpu_custom_call.1} parent=1 // pred_check_branch
      %145 = sbr.rel (0) target = $region61
    $region60: #{tpu_custom_call.1} parent=1 // pred_region
      _
    $region61: #{tpu_custom_call.1} parent=1 // pred_fallthru
      _
    // Predicated region
    $region62: #{tpu_custom_call.1} parent=1 // pred_check
      _
    $region63: #{tpu_custom_call.1} parent=1 // pred_check_branch
      %147 = sbr.rel (0) target = $region65
    $region64: #{tpu_custom_call.1} parent=1 // pred_region
      _
    $region65: #{tpu_custom_call.1} parent=1 // pred_fallthru
      _
    // Predicated region
    $region66: #{tpu_custom_call.1} parent=1 // pred_check
      _
    $region67: #{tpu_custom_call.1} parent=1 // pred_check_branch
      %149 = sbr.rel (0) target = $region69
    $region68: #{tpu_custom_call.1} parent=1 // pred_region
      _
    $region69: #{tpu_custom_call.1} parent=1 // pred_fallthru
      _
    // Predicated region
    $region70: #{tpu_custom_call.1} parent=1 // pred_check
      _
    $region71: #{tpu_custom_call.1} parent=1 // pred_check_branch
      %151 = sbr.rel (0) target = $region73
    $region72: #{tpu_custom_call.1} parent=1 // pred_region
      _
    $region73: #{tpu_custom_call.1} parent=1 // pred_fallthru
      _
    // Predicated region
    $region74: #{tpu_custom_call.1} parent=1 // pred_check
      _
    $region75: #{tpu_custom_call.1} parent=1 // pred_check_branch
      %153 = sbr.rel (0) target = $region77
    $region76: #{tpu_custom_call.1} parent=1 // pred_region
      _
    $region77: #{tpu_custom_call.1} parent=1 // pred_fallthru
      _
    // Predicated region
    $region78: #{tpu_custom_call.1} parent=1 // pred_check
      _
    $region79: #{tpu_custom_call.1} parent=1 // pred_check_branch
      %155 = sbr.rel (0) target = $region81
    $region80: #{tpu_custom_call.1} parent=1 // pred_region
      %156 = dma.done [#allocation3], 256
    $region81: #{tpu_custom_call.1} parent=1 // pred_fallthru
      _
    // Predicated region
    $region82: #{tpu_custom_call.1} parent=1 // pred_check
      _
    $region83: #{tpu_custom_call.1} parent=1 // pred_check_branch
      %158 = sbr.rel (0) target = $region85
    $region84: #{tpu_custom_call.1} parent=1 // pred_region
      %159 = dma.done [#allocation6], 256
    $region85: #{tpu_custom_call.1} parent=1 // pred_fallthru
      _
    // Predicated region
    $region86: #{tpu_custom_call.1} parent=1 // pred_check
      _
    $region87: #{tpu_custom_call.1} parent=1 // pred_check_branch
      %161 = sbr.rel (0) target = $region89
    $region88: #{tpu_custom_call.1} parent=1 // pred_region
      %162 = dma.done [#allocation6], 256
    $region89: #{tpu_custom_call.1} parent=1 // pred_fallthru
      _
    // Predicated region
    $region90: #{tpu_custom_call.1} parent=1 // pred_check
      _
    $region91: #{tpu_custom_call.1} parent=1 // pred_check_branch
      %164 = sbr.rel (0) target = $region93
    $region92: #{tpu_custom_call.1} parent=1 // pred_region
      %165 = dma.done [#allocation9], 256
    $region93: #{tpu_custom_call.1} parent=1 // pred_fallthru
      _
    // Predicated region
    $region94: #{tpu_custom_call.1} parent=1 // pred_check
      _
    $region95: #{tpu_custom_call.1} parent=1 // pred_check_branch
      %167 = sbr.rel (0) target = $region97
    $region96: #{tpu_custom_call.1} parent=1 // pred_region
      %168 = dma.done [#allocation9], 256
    $region97: #{tpu_custom_call.1} parent=1 // pred_fallthru
      _
    // Predicated region
    $region98: #{tpu_custom_call.1} parent=1 // pred_check
      _
    $region99: #{tpu_custom_call.1} parent=1 // pred_check_branch
      %170 = sbr.rel (0) target = $region101
    $region100: #{tpu_custom_call.1} parent=1 // pred_region
      %171 = dma.done [#allocation12], 256
    $region101: #{tpu_custom_call.1} parent=1 // pred_fallthru
      _
    // Predicated region
    $region102: #{tpu_custom_call.1} parent=1 // pred_check
      _
    $region103: #{tpu_custom_call.1} parent=1 // pred_check_branch
      %173 = sbr.rel (0) target = $region105
    $region104: #{tpu_custom_call.1} parent=1 // pred_region
      %174 = dma.done [#allocation12], 16
    $region105: #{tpu_custom_call.1} parent=1 // pred_fallthru
      _
    // Predicated region
    $region106: #{tpu_custom_call.1} parent=1 // pred_check
      _
    $region107: #{tpu_custom_call.1} parent=1 // pred_check_branch
      %176 = sbr.rel (0) target = $region109
    $region108: #{tpu_custom_call.1} parent=1 // pred_region
      %177 = dma.done [#allocation15], 16
    $region109: #{tpu_custom_call.1} parent=1 // pred_fallthru
      _
    // Predicated region
    $region110: #{tpu_custom_call.1} parent=1 // pred_check
      _
    $region111: #{tpu_custom_call.1} parent=1 // pred_check_branch
      %179 = sbr.rel (0) target = $region113
    $region112: #{tpu_custom_call.1} parent=1 // pred_region
      %180 = dma.done [#allocation15], 512
    $region113: #{tpu_custom_call.1} parent=1 // pred_fallthru
      _
    %v182 = vld [vmem:[#allocation2] sm:$0xff]
    %v183 = vld [vmem:[#allocation2 + $0x8] sm:$0xff]
    %v184 = vld [vmem:[%s15] sm:$0x1]
    %v185 = vld [vmem:[%s16] sm:$0x1]
    %vm186 = vcmask 261120
    %v187 = vsel %vm186, %v182, 0.0
    %188 = vadd.xlane.f32.xlu0 %v187
    %v189 = vpop.xlane.xlu0 %188
    %v190 = vsel %vm186, %v183, 0.0
    %191 = vadd.xlane.f32.xlu0 %v190
    %v192 = vpop.xlane.xlu0 %191
    %v193 = vrcp.pop 32.0
    %v194 = vmul.f32 %v189, %v193
    %v195 = vmul.f32 %v192, %v193
    %v196 = vsub.f32 %v182, %v194
    %v197 = vsub.f32 %v183, %v195
    %v198 = vmul.f32 %v196, %v196
    %v199 = vmul.f32 %v197, %v197
    %v200 = vsel %vm186, %v198, 0.0
    %201 = vadd.xlane.f32.xlu0 %v200
    %v202 = vpop.xlane.xlu0 %201
    %v203 = vsel %vm186, %v199, 0.0
    %204 = vadd.xlane.f32.xlu0 %v203
    %v205 = vpop.xlane.xlu0 %204
    %v206 = vmul.f32 %v202, 0.032258064
    %v207 = vmul.f32 %v205, 0.032258064
    %v208 = vrsqrt.pop %v206
    %v209 = vmul.f32 %v206, %v208
    %vm210 = vcmp.eq.f32.partialorder %v206, inf
    %v211 = vsel %vm210, %v206, %v209
    %vm212 = vcmp.eq.f32.partialorder %v206, 0.0
    %v213 = vand.u32 %v206, 2147483648
    %v214 = vsel %vm212, %v213, %v211
    %v215 = vrsqrt.pop %v207
    %v216 = vmul.f32 %v207, %v215
    %vm217 = vcmp.eq.f32.partialorder %v207, inf
    %v218 = vsel %vm217, %v207, %v216
    %vm219 = vcmp.eq.f32.partialorder %v207, 0.0
    %v220 = vand.u32 %v207, 2147483648
    %v221 = vsel %vm219, %v220, %v218
    %v222 = vadd.f32 %v214, 1e-06
    %v223 = vadd.f32 %v221, 1e-06
    %v224 = vrcp.pop %v222
    %v225 = vrcp.pop %v223
    %v227 = vlaneseq
    %v228 = vshrl.u32 %v227, 7
    %v229 = vsub.s32 0, %v228
    %v230 = vrot.slane %v184, %v229
    %v232 = vmul.f32 %v230, %v196
    %v233 = vmul.f32 %v230, %v197
    %v234 = vmul.f32 %v232, %v224
    %v235 = vmul.f32 %v233, %v225
    %v237 = vlaneseq
    %v238 = vshrl.u32 %v237, 7
    %v239 = vsub.s32 0, %v238
    %v240 = vrot.slane %v185, %v239
    %v242 = vadd.f32 %v234, %v240
    %v243 = vadd.f32 %v235, %v240
    %v244 = vpack.c.bf16 %v243, %v242
    %v245 = vld [vmem:[#allocation5] sm:$0xf]
    %v246 = vld [vmem:[#allocation5 + $0x4] sm:$0xf]
    %v247 = vld [vmem:[#allocation5 + $0x8] sm:$0xf]
    %v248 = vld [vmem:[#allocation5 + $0xc] sm:$0xf]
    %v253 = vunpack.c.l.b16 %v245
    %v254 = vunpack.c.l.b16 %v246
    %v255 = vunpack.c.l.b16 %v247
    %v256 = vunpack.c.l.b16 %v248
    %v257 = vpack.c.b16 %v254, %v253
    %v258 = vpack.c.b16 %v256, %v255
    %v262 = vsel %vm186, %v244, 0
    %264 = vmatprep.subr.bf16.mxu0 0
    %265 = vmatpush1.bf16.msra.mxu0 0
    %266 = vmatprep.subr.bf16.mxu0 0
    %267 = vmatpush1.bf16.msra.mxu0 0
    %268 = vmatprep.subr.bf16.mxu0 0
    %269 = vmatpush1.bf16.msra.mxu0 0
    %270 = vmatprep.subr.bf16.mxu0 0
    %271 = vmatpush1.bf16.msra.mxu0 0
    %272 = vmatprep.subr.bf16.mxu0 0
    %273 = vmatpush1.bf16.msra.mxu0 0
    %274 = vmatprep.subr.bf16.mxu0 0
    %275 = vmatpush1.bf16.msra.mxu0 0
    %276 = vmatprep.subr.bf16.mxu0 0
    %277 = vmatpush1.bf16.msra.mxu0 %v258
    %278 = vmatprep.subr.bf16.mxu0 0
    %279 = vmatpush1.bf16.msra.mxu0 %v257
    %280 = vmatprep.subr.bf16.mxu0 0
    %281 = vmatpush2.bf16.msra.mxu0 0
    %282 = vmatprep.subr.bf16.mxu0 0
    %283 = vmatpush2.bf16.msra.mxu0 0
    %284 = vmatprep.subr.bf16.mxu0 0
    %285 = vmatpush2.bf16.msra.mxu0 0
    %286 = vmatprep.subr.bf16.mxu0 0
    %287 = vmatpush2.bf16.msra.mxu0 0
    %288 = vmatprep.subr.bf16.mxu0 0
    %289 = vmatpush2.bf16.msra.mxu0 0
    %290 = vmatprep.subr.bf16.mxu0 0
    %291 = vmatpush2.bf16.msra.mxu0 0
    %292 = vmatprep.subr.bf16.mxu0 0
    %293 = vmatpush2.bf16.msra.mxu0 0
    %294 = vmatprep.subr.bf16.mxu0 0
    %295 = vmatpush2.bf16.msra.mxu0 0
    %296 = vmatprep.mubr.bf16.mxu0 0
    %297 = vmatmul.mubr.bf16.gmra.mxu0 %v262
    %v298 = vpop.f32.mrf.mxu0
    %v299 = vadd.f32 0.0, %v298
    %v300 = vpop.f32.mrf.mxu0
    %v301 = vpop.f32.mrf.mxu0
    %v302 = vadd.f32 0.0, %v301
    %v303 = vpop.f32.mrf.mxu0
    %304 = vdwg.mxu0
    %v305 = vld [vmem:[#allocation7] sm:$0xf]
    %v306 = vld [vmem:[#allocation7 + $0x4] sm:$0xf]
    %v307 = vld [vmem:[#allocation7 + $0x8] sm:$0xf]
    %v308 = vld [vmem:[#allocation7 + $0xc] sm:$0xf]
    %v313 = vunpack.c.l.b16 %v305
    %v314 = vunpack.c.l.b16 %v306
    %v315 = vunpack.c.l.b16 %v307
    %v316 = vunpack.c.l.b16 %v308
    %v317 = vpack.c.b16 %v314, %v313
    %v318 = vpack.c.b16 %v316, %v315
    %321 = vmatprep.subr.bf16.mxu0 0
    %322 = vmatpush1.bf16.msra.mxu0 0
    %323 = vmatprep.subr.bf16.mxu0 0
    %324 = vmatpush1.bf16.msra.mxu0 0
    %325 = vmatprep.subr.bf16.mxu0 0
    %326 = vmatpush1.bf16.msra.mxu0 0
    %327 = vmatprep.subr.bf16.mxu0 0
    %328 = vmatpush1.bf16.msra.mxu0 0
    %329 = vmatprep.subr.bf16.mxu0 0
    %330 = vmatpush1.bf16.msra.mxu0 0
    %331 = vmatprep.subr.bf16.mxu0 0
    %332 = vmatpush1.bf16.msra.mxu0 0
    %333 = vmatprep.subr.bf16.mxu0 0
    %334 = vmatpush1.bf16.msra.mxu0 %v318
    %335 = vmatprep.subr.bf16.mxu0 0
    %336 = vmatpush1.bf16.msra.mxu0 %v317
    %337 = vmatprep.subr.bf16.mxu0 0
    %338 = vmatpush2.bf16.msra.mxu0 0
    %339 = vmatprep.subr.bf16.mxu0 0
    %340 = vmatpush2.bf16.msra.mxu0 0
    %341 = vmatprep.subr.bf16.mxu0 0
    %342 = vmatpush2.bf16.msra.mxu0 0
    %343 = vmatprep.subr.bf16.mxu0 0
    %344 = vmatpush2.bf16.msra.mxu0 0
    %345 = vmatprep.subr.bf16.mxu0 0
    %346 = vmatpush2.bf16.msra.mxu0 0
    %347 = vmatprep.subr.bf16.mxu0 0
    %348 = vmatpush2.bf16.msra.mxu0 0
    %349 = vmatprep.subr.bf16.mxu0 0
    %350 = vmatpush2.bf16.msra.mxu0 0
    %351 = vmatprep.subr.bf16.mxu0 0
    %352 = vmatpush2.bf16.msra.mxu0 0
    %353 = vmatprep.mubr.bf16.mxu0 0
    %354 = vmatmul.mubr.bf16.gmra.mxu0 %v262
    %v355 = vpop.f32.mrf.mxu0
    %v356 = vadd.f32 0.0, %v355
    %v357 = vpop.f32.mrf.mxu0
    %v358 = vpop.f32.mrf.mxu0
    %v359 = vadd.f32 0.0, %v358
    %v360 = vpop.f32.mrf.mxu0
    %361 = vdwg.mxu0
    %v362 = vld [vmem:[#allocation8] sm:$0xf]
    %v363 = vld [vmem:[#allocation8 + $0x4] sm:$0xf]
    %v364 = vld [vmem:[#allocation8 + $0x8] sm:$0xf]
    %v365 = vld [vmem:[#allocation8 + $0xc] sm:$0xf]
    %v370 = vunpack.c.l.b16 %v362
    %v371 = vunpack.c.l.b16 %v363
    %v372 = vunpack.c.l.b16 %v364
    %v373 = vunpack.c.l.b16 %v365
    %v374 = vpack.c.b16 %v371, %v370
    %v375 = vpack.c.b16 %v373, %v372
    %378 = vmatprep.subr.bf16.mxu0 0
    %379 = vmatpush1.bf16.msra.mxu0 0
    %380 = vmatprep.subr.bf16.mxu0 0
    %381 = vmatpush1.bf16.msra.mxu0 0
    %382 = vmatprep.subr.bf16.mxu0 0
    %383 = vmatpush1.bf16.msra.mxu0 0
    %384 = vmatprep.subr.bf16.mxu0 0
    %385 = vmatpush1.bf16.msra.mxu0 0
    %386 = vmatprep.subr.bf16.mxu0 0
    %387 = vmatpush1.bf16.msra.mxu0 0
    %388 = vmatprep.subr.bf16.mxu0 0
    %389 = vmatpush1.bf16.msra.mxu0 0
    %390 = vmatprep.subr.bf16.mxu0 0
    %391 = vmatpush1.bf16.msra.mxu0 %v375
    %392 = vmatprep.subr.bf16.mxu0 0
    %393 = vmatpush1.bf16.msra.mxu0 %v374
    %394 = vmatprep.subr.bf16.mxu0 0
    %395 = vmatpush2.bf16.msra.mxu0 0
    %396 = vmatprep.subr.bf16.mxu0 0
    %397 = vmatpush2.bf16.msra.mxu0 0
    %398 = vmatprep.subr.bf16.mxu0 0
    %399 = vmatpush2.bf16.msra.mxu0 0
    %400 = vmatprep.subr.bf16.mxu0 0
    %401 = vmatpush2.bf16.msra.mxu0 0
    %402 = vmatprep.subr.bf16.mxu0 0
    %403 = vmatpush2.bf16.msra.mxu0 0
    %404 = vmatprep.subr.bf16.mxu0 0
    %405 = vmatpush2.bf16.msra.mxu0 0
    %406 = vmatprep.subr.bf16.mxu0 0
    %407 = vmatpush2.bf16.msra.mxu0 0
    %408 = vmatprep.subr.bf16.mxu0 0
    %409 = vmatpush2.bf16.msra.mxu0 0
    %410 = vmatprep.mubr.bf16.mxu0 0
    %411 = vmatmul.mubr.bf16.gmra.mxu0 %v262
    %v412 = vpop.f32.mrf.mxu0
    %v413 = vadd.f32 0.0, %v412
    %v414 = vpop.f32.mrf.mxu0
    %v415 = vpop.f32.mrf.mxu0
    %v416 = vadd.f32 0.0, %v415
    %v417 = vpop.f32.mrf.mxu0
    %418 = vdwg.mxu0
    %v419 = vmul.f32 %v299, 0.35355338
    %v420 = vmul.f32 %v302, 0.35355338
    %v421 = vpack.c.bf16 %v419, %v419
    %v422 = vpack.c.bf16 %v420, %v420
    %v423 = vpack.c.bf16 %v356, %v356
    %v424 = vpack.c.bf16 %v359, %v359
    %v425 = vpack.c.bf16 %v413, %v413
    %v426 = vpack.c.bf16 %v416, %v416
    %vm427 = vcmask 64512
    %v429 = vsel %vm427, %v421, 0
    %v432 = vsel %vm427, %v423, 0
    %434 = vmatprep.subr.bf16.mxu0 0
    %435 = vmatpush1.bf16.xpose.msra.mxu0 0
    %436 = vmatprep.subr.bf16.mxu0 0
    %437 = vmatpush1.bf16.xpose.msra.mxu0 0
    %438 = vmatprep.subr.bf16.mxu0 0
    %439 = vmatpush1.bf16.xpose.msra.mxu0 0
    %440 = vmatprep.subr.bf16.mxu0 0
    %441 = vmatpush1.bf16.xpose.msra.mxu0 0
    %442 = vmatprep.subr.bf16.mxu0 0
    %443 = vmatpush1.bf16.xpose.msra.mxu0 0
    %444 = vmatprep.subr.bf16.mxu0 0
    %445 = vmatpush1.bf16.xpose.msra.mxu0 0
    %446 = vmatprep.subr.bf16.mxu0 0
    %447 = vmatpush1.bf16.xpose.msra.mxu0 0
    %448 = vmatprep.subr.bf16.mxu0 0
    %449 = vmatpush1.bf16.xpose.msra.mxu0 %v432
    %450 = vmatprep.subr.bf16.mxu0 0
    %451 = vmatpush2.bf16.xpose.msra.mxu0 0
    %452 = vmatprep.subr.bf16.mxu0 0
    %453 = vmatpush2.bf16.xpose.msra.mxu0 0
    %454 = vmatprep.subr.bf16.mxu0 0
    %455 = vmatpush2.bf16.xpose.msra.mxu0 0
    %456 = vmatprep.subr.bf16.mxu0 0
    %457 = vmatpush2.bf16.xpose.msra.mxu0 0
    %458 = vmatprep.subr.bf16.mxu0 0
    %459 = vmatpush2.bf16.xpose.msra.mxu0 0
    %460 = vmatprep.subr.bf16.mxu0 0
    %461 = vmatpush2.bf16.xpose.msra.mxu0 0
    %462 = vmatprep.subr.bf16.mxu0 0
    %463 = vmatpush2.bf16.xpose.msra.mxu0 0
    %464 = vmatprep.subr.bf16.mxu0 0
    %465 = vmatpush2.bf16.xpose.msra.mxu0 0
    %466 = vmatprep.mubr.bf16.mxu0 0
    %467 = vmatmul.mubr.bf16.gmra.mxu0 %v429
    %v468 = vpop.f32.mrf.mxu0
    %v469 = vadd.f32 0.0, %v468
    %v470 = vpop.f32.mrf.mxu0
    %v471 = vpop.f32.mrf.mxu0
    %v472 = vpop.f32.mrf.mxu0
    %473 = vdwg.mxu0
    %v475 = vsel %vm427, %v422, 0
    %v478 = vsel %vm427, %v424, 0
    %480 = vmatprep.subr.bf16.mxu0 0
    %481 = vmatpush1.bf16.xpose.msra.mxu0 0
    %482 = vmatprep.subr.bf16.mxu0 0
    %483 = vmatpush1.bf16.xpose.msra.mxu0 0
    %484 = vmatprep.subr.bf16.mxu0 0
    %485 = vmatpush1.bf16.xpose.msra.mxu0 0
    %486 = vmatprep.subr.bf16.mxu0 0
    %487 = vmatpush1.bf16.xpose.msra.mxu0 0
    %488 = vmatprep.subr.bf16.mxu0 0
    %489 = vmatpush1.bf16.xpose.msra.mxu0 0
    %490 = vmatprep.subr.bf16.mxu0 0
    %491 = vmatpush1.bf16.xpose.msra.mxu0 0
    %492 = vmatprep.subr.bf16.mxu0 0
    %493 = vmatpush1.bf16.xpose.msra.mxu0 0
    %494 = vmatprep.subr.bf16.mxu0 0
    %495 = vmatpush1.bf16.xpose.msra.mxu0 %v478
    %496 = vmatprep.subr.bf16.mxu0 0
    %497 = vmatpush2.bf16.xpose.msra.mxu0 0
    %498 = vmatprep.subr.bf16.mxu0 0
    %499 = vmatpush2.bf16.xpose.msra.mxu0 0
    %500 = vmatprep.subr.bf16.mxu0 0
    %501 = vmatpush2.bf16.xpose.msra.mxu0 0
    %502 = vmatprep.subr.bf16.mxu0 0
    %503 = vmatpush2.bf16.xpose.msra.mxu0 0
    %504 = vmatprep.subr.bf16.mxu0 0
    %505 = vmatpush2.bf16.xpose.msra.mxu0 0
    %506 = vmatprep.subr.bf16.mxu0 0
    %507 = vmatpush2.bf16.xpose.msra.mxu0 0
    %508 = vmatprep.subr.bf16.mxu0 0
    %509 = vmatpush2.bf16.xpose.msra.mxu0 0
    %510 = vmatprep.subr.bf16.mxu0 0
    %511 = vmatpush2.bf16.xpose.msra.mxu0 0
    %512 = vmatprep.mubr.bf16.mxu0 0
    %513 = vmatmul.mubr.bf16.gmra.mxu0 %v475
    %v514 = vpop.f32.mrf.mxu0
    %v515 = vadd.f32 0.0, %v514
    %v516 = vpop.f32.mrf.mxu0
    %v517 = vpop.f32.mrf.mxu0
    %v518 = vpop.f32.mrf.mxu0
    %519 = vdwg.mxu0
    %v520 = vsel %vm427, %v469, -inf
    %521 = vmax.xlane.f32.xlu0 %v520
    %v522 = vpop.xlane.xlu0 %521
    %v523 = vsel %vm427, %v515, -inf
    %524 = vmax.xlane.f32.xlu0 %v523
    %v525 = vpop.xlane.xlu0 %524
    %v526 = vsub.f32 %v469, %v522
    %v527 = vsub.f32 %v515, %v525
    %v528 = vmul.f32 %v526, 1.442695
    %v529 = vpow.pop %v528
    %v530 = vmul.f32 %v527, 1.442695
    %v531 = vpow.pop %v530
    %v532 = vsel %vm427, %v529, 0.0
    %533 = vadd.xlane.f32.xlu0 %v532
    %v534 = vpop.xlane.xlu0 %533
    %v535 = vsel %vm427, %v531, 0.0
    %536 = vadd.xlane.f32.xlu0 %v535
    %v537 = vpop.xlane.xlu0 %536
    %v538 = vrcp.pop %v534
    %v539 = vrcp.pop %v537
    %v540 = vmul.f32 %v529, %v538
    %v541 = vmul.f32 %v531, %v539
    %v542 = vpack.c.bf16 %v540, %v540
    %v543 = vpack.c.bf16 %v541, %v541
    %v545 = vsel %vm427, %v542, 0
    %vm547 = vcmask 1043456
    %v549 = vsel %vm547, %v425, 0
    %551 = vmatprep.subr.bf16.mxu0 0
    %552 = vmatpush1.bf16.msra.mxu0 0
    %553 = vmatprep.subr.bf16.mxu0 0
    %554 = vmatpush1.bf16.msra.mxu0 0
    %555 = vmatprep.subr.bf16.mxu0 0
    %556 = vmatpush1.bf16.msra.mxu0 0
    %557 = vmatprep.subr.bf16.mxu0 0
    %558 = vmatpush1.bf16.msra.mxu0 0
    %559 = vmatprep.subr.bf16.mxu0 0
    %560 = vmatpush1.bf16.msra.mxu0 0
    %561 = vmatprep.subr.bf16.mxu0 0
    %562 = vmatpush1.bf16.msra.mxu0 0
    %563 = vmatprep.subr.bf16.mxu0 0
    %564 = vmatpush1.bf16.msra.mxu0 0
    %565 = vmatprep.subr.bf16.mxu0 0
    %566 = vmatpush1.bf16.msra.mxu0 %v549
    %567 = vmatprep.subr.bf16.mxu0 0
    %568 = vmatpush2.bf16.msra.mxu0 0
    %569 = vmatprep.subr.bf16.mxu0 0
    %570 = vmatpush2.bf16.msra.mxu0 0
    %571 = vmatprep.subr.bf16.mxu0 0
    %572 = vmatpush2.bf16.msra.mxu0 0
    %573 = vmatprep.subr.bf16.mxu0 0
    %574 = vmatpush2.bf16.msra.mxu0 0
    %575 = vmatprep.subr.bf16.mxu0 0
    %576 = vmatpush2.bf16.msra.mxu0 0
    %577 = vmatprep.subr.bf16.mxu0 0
    %578 = vmatpush2.bf16.msra.mxu0 0
    %579 = vmatprep.subr.bf16.mxu0 0
    %580 = vmatpush2.bf16.msra.mxu0 0
    %581 = vmatprep.subr.bf16.mxu0 0
    %582 = vmatpush2.bf16.msra.mxu0 0
    %583 = vmatprep.mubr.bf16.mxu0 0
    %584 = vmatmul.mubr.bf16.gmra.mxu0 %v545
    %v585 = vpop.f32.mrf.mxu0
    %v586 = vadd.f32 0.0, %v585
    %v587 = vpop.f32.mrf.mxu0
    %v588 = vpop.f32.mrf.mxu0
    %v589 = vpop.f32.mrf.mxu0
    %590 = vdwg.mxu0
    %v592 = vsel %vm427, %v543, 0
    %v595 = vsel %vm547, %v426, 0
    %597 = vmatprep.subr.bf16.mxu0 0
    %598 = vmatpush1.bf16.msra.mxu0 0
    %599 = vmatprep.subr.bf16.mxu0 0
    %600 = vmatpush1.bf16.msra.mxu0 0
    %601 = vmatprep.subr.bf16.mxu0 0
    %602 = vmatpush1.bf16.msra.mxu0 0
    %603 = vmatprep.subr.bf16.mxu0 0
    %604 = vmatpush1.bf16.msra.mxu0 0
    %605 = vmatprep.subr.bf16.mxu0 0
    %606 = vmatpush1.bf16.msra.mxu0 0
    %607 = vmatprep.subr.bf16.mxu0 0
    %608 = vmatpush1.bf16.msra.mxu0 0
    %609 = vmatprep.subr.bf16.mxu0 0
    %610 = vmatpush1.bf16.msra.mxu0 0
    %611 = vmatprep.subr.bf16.mxu0 0
    %612 = vmatpush1.bf16.msra.mxu0 %v595
    %613 = vmatprep.subr.bf16.mxu0 0
    %614 = vmatpush2.bf16.msra.mxu0 0
    %615 = vmatprep.subr.bf16.mxu0 0
    %616 = vmatpush2.bf16.msra.mxu0 0
    %617 = vmatprep.subr.bf16.mxu0 0
    %618 = vmatpush2.bf16.msra.mxu0 0
    %619 = vmatprep.subr.bf16.mxu0 0
    %620 = vmatpush2.bf16.msra.mxu0 0
    %621 = vmatprep.subr.bf16.mxu0 0
    %622 = vmatpush2.bf16.msra.mxu0 0
    %623 = vmatprep.subr.bf16.mxu0 0
    %624 = vmatpush2.bf16.msra.mxu0 0
    %625 = vmatprep.subr.bf16.mxu0 0
    %626 = vmatpush2.bf16.msra.mxu0 0
    %627 = vmatprep.subr.bf16.mxu0 0
    %628 = vmatpush2.bf16.msra.mxu0 0
    %629 = vmatprep.mubr.bf16.mxu0 0
    %630 = vmatmul.mubr.bf16.gmra.mxu0 %v592
    %v631 = vpop.f32.mrf.mxu0
    %v632 = vadd.f32 0.0, %v631
    %v633 = vpop.f32.mrf.mxu0
    %v634 = vpop.f32.mrf.mxu0
    %v635 = vpop.f32.mrf.mxu0
    %636 = vdwg.mxu0
    %v637 = vpack.c.bf16 %v632, %v586
    %v638 = vld [vmem:[#allocation10] sm:$0xf]
    %640 = vrot.lane.b32.xlu0 %v421, 120
    %v641 = vpop.permute.xlu0 %640
    %643 = vrot.lane.b32.xlu0 %v423, 120
    %v644 = vpop.permute.xlu0 %643
    %v646 = vsel %vm427, %v641, 0
    %v649 = vsel %vm427, %v644, 0
    %651 = vmatprep.subr.bf16.mxu0 0
    %652 = vmatpush1.bf16.xpose.msra.mxu0 0
    %653 = vmatprep.subr.bf16.mxu0 0
    %654 = vmatpush1.bf16.xpose.msra.mxu0 0
    %655 = vmatprep.subr.bf16.mxu0 0
    %656 = vmatpush1.bf16.xpose.msra.mxu0 0
    %657 = vmatprep.subr.bf16.mxu0 0
    %658 = vmatpush1.bf16.xpose.msra.mxu0 0
    %659 = vmatprep.subr.bf16.mxu0 0
    %660 = vmatpush1.bf16.xpose.msra.mxu0 0
    %661 = vmatprep.subr.bf16.mxu0 0
    %662 = vmatpush1.bf16.xpose.msra.mxu0 0
    %663 = vmatprep.subr.bf16.mxu0 0
    %664 = vmatpush1.bf16.xpose.msra.mxu0 0
    %665 = vmatprep.subr.bf16.mxu0 0
    %666 = vmatpush1.bf16.xpose.msra.mxu0 %v649
    %667 = vmatprep.subr.bf16.mxu0 0
    %668 = vmatpush2.bf16.xpose.msra.mxu0 0
    %669 = vmatprep.subr.bf16.mxu0 0
    %670 = vmatpush2.bf16.xpose.msra.mxu0 0
    %671 = vmatprep.subr.bf16.mxu0 0
    %672 = vmatpush2.bf16.xpose.msra.mxu0 0
    %673 = vmatprep.subr.bf16.mxu0 0
    %674 = vmatpush2.bf16.xpose.msra.mxu0 0
    %675 = vmatprep.subr.bf16.mxu0 0
    %676 = vmatpush2.bf16.xpose.msra.mxu0 0
    %677 = vmatprep.subr.bf16.mxu0 0
    %678 = vmatpush2.bf16.xpose.msra.mxu0 0
    %679 = vmatprep.subr.bf16.mxu0 0
    %680 = vmatpush2.bf16.xpose.msra.mxu0 0
    %681 = vmatprep.subr.bf16.mxu0 0
    %682 = vmatpush2.bf16.xpose.msra.mxu0 0
    %683 = vmatprep.mubr.bf16.mxu0 0
    %684 = vmatmul.mubr.bf16.gmra.mxu0 %v646
    %v685 = vpop.f32.mrf.mxu0
    %v686 = vadd.f32 0.0, %v685
    %v687 = vpop.f32.mrf.mxu0
    %v688 = vpop.f32.mrf.mxu0
    %v689 = vpop.f32.mrf.mxu0
    %690 = vdwg.mxu0
    %692 = vrot.lane.b32.xlu0 %v422, 120
    %v693 = vpop.permute.xlu0 %692
    %695 = vrot.lane.b32.xlu0 %v424, 120
    %v696 = vpop.permute.xlu0 %695
    %v698 = vsel %vm427, %v693, 0
    %v701 = vsel %vm427, %v696, 0
    %703 = vmatprep.subr.bf16.mxu0 0
    %704 = vmatpush1.bf16.xpose.msra.mxu0 0
    %705 = vmatprep.subr.bf16.mxu0 0
    %706 = vmatpush1.bf16.xpose.msra.mxu0 0
    %707 = vmatprep.subr.bf16.mxu0 0
    %708 = vmatpush1.bf16.xpose.msra.mxu0 0
    %709 = vmatprep.subr.bf16.mxu0 0
    %710 = vmatpush1.bf16.xpose.msra.mxu0 0
    %711 = vmatprep.subr.bf16.mxu0 0
    %712 = vmatpush1.bf16.xpose.msra.mxu0 0
    %713 = vmatprep.subr.bf16.mxu0 0
    %714 = vmatpush1.bf16.xpose.msra.mxu0 0
    %715 = vmatprep.subr.bf16.mxu0 0
    %716 = vmatpush1.bf16.xpose.msra.mxu0 0
    %717 = vmatprep.subr.bf16.mxu0 0
    %718 = vmatpush1.bf16.xpose.msra.mxu0 %v701
    %719 = vmatprep.subr.bf16.mxu0 0
    %720 = vmatpush2.bf16.xpose.msra.mxu0 0
    %721 = vmatprep.subr.bf16.mxu0 0
    %722 = vmatpush2.bf16.xpose.msra.mxu0 0
    %723 = vmatprep.subr.bf16.mxu0 0
    %724 = vmatpush2.bf16.xpose.msra.mxu0 0
    %725 = vmatprep.subr.bf16.mxu0 0
    %726 = vmatpush2.bf16.xpose.msra.mxu0 0
    %727 = vmatprep.subr.bf16.mxu0 0
    %728 = vmatpush2.bf16.xpose.msra.mxu0 0
    %729 = vmatprep.subr.bf16.mxu0 0
    %730 = vmatpush2.bf16.xpose.msra.mxu0 0
    %731 = vmatprep.subr.bf16.mxu0 0
    %732 = vmatpush2.bf16.xpose.msra.mxu0 0
    %733 = vmatprep.subr.bf16.mxu0 0
    %734 = vmatpush2.bf16.xpose.msra.mxu0 0
    %735 = vmatprep.mubr.bf16.mxu0 0
    %736 = vmatmul.mubr.bf16.gmra.mxu0 %v698
    %v737 = vpop.f32.mrf.mxu0
    %v738 = vadd.f32 0.0, %v737
    %v739 = vpop.f32.mrf.mxu0
    %v740 = vpop.f32.mrf.mxu0
    %v741 = vpop.f32.mrf.mxu0
    %742 = vdwg.mxu0
    %v743 = vsel %vm427, %v686, -inf
    %744 = vmax.xlane.f32.xlu0 %v743
    %v745 = vpop.xlane.xlu0 %744
    %v746 = vsel %vm427, %v738, -inf
    %747 = vmax.xlane.f32.xlu0 %v746
    %v748 = vpop.xlane.xlu0 %747
    %v749 = vsub.f32 %v686, %v745
    %v750 = vsub.f32 %v738, %v748
    %v751 = vmul.f32 %v749, 1.442695
    %v752 = vpow.pop %v751
    %v753 = vmul.f32 %v750, 1.442695
    %v754 = vpow.pop %v753
    %v755 = vsel %vm427, %v752, 0.0
    %756 = vadd.xlane.f32.xlu0 %v755
    %v757 = vpop.xlane.xlu0 %756
    %v758 = vsel %vm427, %v754, 0.0
    %759 = vadd.xlane.f32.xlu0 %v758
    %v760 = vpop.xlane.xlu0 %759
    %v761 = vrcp.pop %v757
    %v762 = vrcp.pop %v760
    %v763 = vmul.f32 %v752, %v761
    %v764 = vmul.f32 %v754, %v762
    %v765 = vpack.c.bf16 %v763, %v763
    %v766 = vpack.c.bf16 %v764, %v764
    %768 = vrot.lane.b32.xlu0 %v425, 120
    %v769 = vpop.permute.xlu0 %768
    %v771 = vsel %vm427, %v765, 0
    %v774 = vsel %vm547, %v769, 0
    %776 = vmatprep.subr.bf16.mxu0 0
    %777 = vmatpush1.bf16.msra.mxu0 0
    %778 = vmatprep.subr.bf16.mxu0 0
    %779 = vmatpush1.bf16.msra.mxu0 0
    %780 = vmatprep.subr.bf16.mxu0 0
    %781 = vmatpush1.bf16.msra.mxu0 0
    %782 = vmatprep.subr.bf16.mxu0 0
    %783 = vmatpush1.bf16.msra.mxu0 0
    %784 = vmatprep.subr.bf16.mxu0 0
    %785 = vmatpush1.bf16.msra.mxu0 0
    %786 = vmatprep.subr.bf16.mxu0 0
    %787 = vmatpush1.bf16.msra.mxu0 0
    %788 = vmatprep.subr.bf16.mxu0 0
    %789 = vmatpush1.bf16.msra.mxu0 0
    %790 = vmatprep.subr.bf16.mxu0 0
    %791 = vmatpush1.bf16.msra.mxu0 %v774
    %792 = vmatprep.subr.bf16.mxu0 0
    %793 = vmatpush2.bf16.msra.mxu0 0
    %794 = vmatprep.subr.bf16.mxu0 0
    %795 = vmatpush2.bf16.msra.mxu0 0
    %796 = vmatprep.subr.bf16.mxu0 0
    %797 = vmatpush2.bf16.msra.mxu0 0
    %798 = vmatprep.subr.bf16.mxu0 0
    %799 = vmatpush2.bf16.msra.mxu0 0
    %800 = vmatprep.subr.bf16.mxu0 0
    %801 = vmatpush2.bf16.msra.mxu0 0
    %802 = vmatprep.subr.bf16.mxu0 0
    %803 = vmatpush2.bf16.msra.mxu0 0
    %804 = vmatprep.subr.bf16.mxu0 0
    %805 = vmatpush2.bf16.msra.mxu0 0
    %806 = vmatprep.subr.bf16.mxu0 0
    %807 = vmatpush2.bf16.msra.mxu0 0
    %808 = vmatprep.mubr.bf16.mxu0 0
    %809 = vmatmul.mubr.bf16.gmra.mxu0 %v771
    %v810 = vpop.f32.mrf.mxu0
    %v811 = vadd.f32 0.0, %v810
    %v812 = vpop.f32.mrf.mxu0
    %v813 = vpop.f32.mrf.mxu0
    %v814 = vpop.f32.mrf.mxu0
    %815 = vdwg.mxu0
    %817 = vrot.lane.b32.xlu0 %v426, 120
    %v818 = vpop.permute.xlu0 %817
    %v820 = vsel %vm427, %v766, 0
    %v823 = vsel %vm547, %v818, 0
    %825 = vmatprep.subr.bf16.mxu0 0
    %826 = vmatpush1.bf16.msra.mxu0 0
    %827 = vmatprep.subr.bf16.mxu0 0
    %828 = vmatpush1.bf16.msra.mxu0 0
    %829 = vmatprep.subr.bf16.mxu0 0
    %830 = vmatpush1.bf16.msra.mxu0 0
    %831 = vmatprep.subr.bf16.mxu0 0
    %832 = vmatpush1.bf16.msra.mxu0 0
    %833 = vmatprep.subr.bf16.mxu0 0
    %834 = vmatpush1.bf16.msra.mxu0 0
    %835 = vmatprep.subr.bf16.mxu0 0
    %836 = vmatpush1.bf16.msra.mxu0 0
    %837 = vmatprep.subr.bf16.mxu0 0
    %838 = vmatpush1.bf16.msra.mxu0 0
    %839 = vmatprep.subr.bf16.mxu0 0
    %840 = vmatpush1.bf16.msra.mxu0 %v823
    %841 = vmatprep.subr.bf16.mxu0 0
    %842 = vmatpush2.bf16.msra.mxu0 0
    %843 = vmatprep.subr.bf16.mxu0 0
    %844 = vmatpush2.bf16.msra.mxu0 0
    %845 = vmatprep.subr.bf16.mxu0 0
    %846 = vmatpush2.bf16.msra.mxu0 0
    %847 = vmatprep.subr.bf16.mxu0 0
    %848 = vmatpush2.bf16.msra.mxu0 0
    %849 = vmatprep.subr.bf16.mxu0 0
    %850 = vmatpush2.bf16.msra.mxu0 0
    %851 = vmatprep.subr.bf16.mxu0 0
    %852 = vmatpush2.bf16.msra.mxu0 0
    %853 = vmatprep.subr.bf16.mxu0 0
    %854 = vmatpush2.bf16.msra.mxu0 0
    %855 = vmatprep.subr.bf16.mxu0 0
    %856 = vmatpush2.bf16.msra.mxu0 0
    %857 = vmatprep.mubr.bf16.mxu0 0
    %858 = vmatmul.mubr.bf16.gmra.mxu0 %v820
    %v859 = vpop.f32.mrf.mxu0
    %v860 = vadd.f32 0.0, %v859
    %v861 = vpop.f32.mrf.mxu0
    %v862 = vpop.f32.mrf.mxu0
    %v863 = vpop.f32.mrf.mxu0
    %864 = vdwg.mxu0
    %v865 = vpack.c.bf16 %v860, %v811
    %s866 = scalar_lea.vmem [#allocation10], 4
    %v867 = vld [vmem:[%s866] sm:$0xf]
    %v869 = vsel %vm427, %v865, 0
    %v872 = vsel %vm547, %v867, 0
    %874 = vmatprep.subr.bf16.mxu0 0
    %875 = vmatpush1.bf16.msra.mxu0 0
    %876 = vmatprep.subr.bf16.mxu0 0
    %877 = vmatpush1.bf16.msra.mxu0 0
    %878 = vmatprep.subr.bf16.mxu0 0
    %879 = vmatpush1.bf16.msra.mxu0 0
    %880 = vmatprep.subr.bf16.mxu0 0
    %881 = vmatpush1.bf16.msra.mxu0 0
    %882 = vmatprep.subr.bf16.mxu0 0
    %883 = vmatpush1.bf16.msra.mxu0 0
    %884 = vmatprep.subr.bf16.mxu0 0
    %885 = vmatpush1.bf16.msra.mxu0 0
    %886 = vmatprep.subr.bf16.mxu0 0
    %887 = vmatpush1.bf16.msra.mxu0 0
    %888 = vmatprep.subr.bf16.mxu0 0
    %889 = vmatpush1.bf16.msra.mxu0 %v872
    %890 = vmatprep.subr.bf16.mxu0 0
    %891 = vmatpush2.bf16.msra.mxu0 0
    %892 = vmatprep.subr.bf16.mxu0 0
    %893 = vmatpush2.bf16.msra.mxu0 0
    %894 = vmatprep.subr.bf16.mxu0 0
    %895 = vmatpush2.bf16.msra.mxu0 0
    %896 = vmatprep.subr.bf16.mxu0 0
    %897 = vmatpush2.bf16.msra.mxu0 0
    %898 = vmatprep.subr.bf16.mxu0 0
    %899 = vmatpush2.bf16.msra.mxu0 0
    %900 = vmatprep.subr.bf16.mxu0 0
    %901 = vmatpush2.bf16.msra.mxu0 0
    %902 = vmatprep.subr.bf16.mxu0 0
    %903 = vmatpush2.bf16.msra.mxu0 0
    %904 = vmatprep.subr.bf16.mxu0 0
    %905 = vmatpush2.bf16.msra.mxu0 0
    %906 = vmatprep.mubr.bf16.mxu0 0
    %907 = vmatmul.mubr.bf16.gmra.mxu0 %v869
    %v908 = vpop.f32.mrf.mxu0
    %v909 = vadd.f32 0.0, %v908
    %v910 = vpop.f32.mrf.mxu0
    %v911 = vpop.f32.mrf.mxu0
    %v912 = vadd.f32 0.0, %v911
    %v913 = vpop.f32.mrf.mxu0
    %914 = vdwg.mxu0
    %v916 = vsel %vm427, %v637, 0
    %v919 = vsel %vm547, %v638, 0
    %921 = vmatprep.subr.bf16.mxu0 0
    %922 = vmatpush1.bf16.msra.mxu0 0
    %923 = vmatprep.subr.bf16.mxu0 0
    %924 = vmatpush1.bf16.msra.mxu0 0
    %925 = vmatprep.subr.bf16.mxu0 0
    %926 = vmatpush1.bf16.msra.mxu0 0
    %927 = vmatprep.subr.bf16.mxu0 0
    %928 = vmatpush1.bf16.msra.mxu0 0
    %929 = vmatprep.subr.bf16.mxu0 0
    %930 = vmatpush1.bf16.msra.mxu0 0
    %931 = vmatprep.subr.bf16.mxu0 0
    %932 = vmatpush1.bf16.msra.mxu0 0
    %933 = vmatprep.subr.bf16.mxu0 0
    %934 = vmatpush1.bf16.msra.mxu0 0
    %935 = vmatprep.subr.bf16.mxu0 0
    %936 = vmatpush1.bf16.msra.mxu0 %v919
    %937 = vmatprep.subr.bf16.mxu0 0
    %938 = vmatpush2.bf16.msra.mxu0 0
    %939 = vmatprep.subr.bf16.mxu0 0
    %940 = vmatpush2.bf16.msra.mxu0 0
    %941 = vmatprep.subr.bf16.mxu0 0
    %942 = vmatpush2.bf16.msra.mxu0 0
    %943 = vmatprep.subr.bf16.mxu0 0
    %944 = vmatpush2.bf16.msra.mxu0 0
    %945 = vmatprep.subr.bf16.mxu0 0
    %946 = vmatpush2.bf16.msra.mxu0 0
    %947 = vmatprep.subr.bf16.mxu0 0
    %948 = vmatpush2.bf16.msra.mxu0 0
    %949 = vmatprep.subr.bf16.mxu0 0
    %950 = vmatpush2.bf16.msra.mxu0 0
    %951 = vmatprep.subr.bf16.mxu0 0
    %952 = vmatpush2.bf16.msra.mxu0 0
    %953 = vmatprep.mubr.bf16.mxu0 0
    %954 = vmatmul.mubr.bf16.gmra.mxu0 %v916
    %v955 = vpop.f32.mrf.mxu0
    %v956 = vadd.f32 %v909, %v955
    %v957 = vpop.f32.mrf.mxu0
    %v958 = vpop.f32.mrf.mxu0
    %v959 = vadd.f32 %v912, %v958
    %v960 = vpop.f32.mrf.mxu0
    %961 = vdwg.mxu0
    %962 = vrot.lane.b32.xlu0 %v421, 112
    %v963 = vpop.permute.xlu0 %962
    %964 = vrot.lane.b32.xlu0 %v423, 112
    %v965 = vpop.permute.xlu0 %964
    %v967 = vsel %vm427, %v963, 0
    %v970 = vsel %vm427, %v965, 0
    %972 = vmatprep.subr.bf16.mxu0 0
    %973 = vmatpush1.bf16.xpose.msra.mxu0 0
    %974 = vmatprep.subr.bf16.mxu0 0
    %975 = vmatpush1.bf16.xpose.msra.mxu0 0
    %976 = vmatprep.subr.bf16.mxu0 0
    %977 = vmatpush1.bf16.xpose.msra.mxu0 0
    %978 = vmatprep.subr.bf16.mxu0 0
    %979 = vmatpush1.bf16.xpose.msra.mxu0 0
    %980 = vmatprep.subr.bf16.mxu0 0
    %981 = vmatpush1.bf16.xpose.msra.mxu0 0
    %982 = vmatprep.subr.bf16.mxu0 0
    %983 = vmatpush1.bf16.xpose.msra.mxu0 0
    %984 = vmatprep.subr.bf16.mxu0 0
    %985 = vmatpush1.bf16.xpose.msra.mxu0 0
    %986 = vmatprep.subr.bf16.mxu0 0
    %987 = vmatpush1.bf16.xpose.msra.mxu0 %v970
    %988 = vmatprep.subr.bf16.mxu0 0
    %989 = vmatpush2.bf16.xpose.msra.mxu0 0
    %990 = vmatprep.subr.bf16.mxu0 0
    %991 = vmatpush2.bf16.xpose.msra.mxu0 0
    %992 = vmatprep.subr.bf16.mxu0 0
    %993 = vmatpush2.bf16.xpose.msra.mxu0 0
    %994 = vmatprep.subr.bf16.mxu0 0
    %995 = vmatpush2.bf16.xpose.msra.mxu0 0
    %996 = vmatprep.subr.bf16.mxu0 0
    %997 = vmatpush2.bf16.xpose.msra.mxu0 0
    %998 = vmatprep.subr.bf16.mxu0 0
    %999 = vmatpush2.bf16.xpose.msra.mxu0 0
    %1000 = vmatprep.subr.bf16.mxu0 0
    %1001 = vmatpush2.bf16.xpose.msra.mxu0 0
    %1002 = vmatprep.subr.bf16.mxu0 0
    %1003 = vmatpush2.bf16.xpose.msra.mxu0 0
    %1004 = vmatprep.mubr.bf16.mxu0 0
    %1005 = vmatmul.mubr.bf16.gmra.mxu0 %v967
    %v1006 = vpop.f32.mrf.mxu0
    %v1007 = vadd.f32 0.0, %v1006
    %v1008 = vpop.f32.mrf.mxu0
    %v1009 = vpop.f32.mrf.mxu0
    %v1010 = vpop.f32.mrf.mxu0
    %1011 = vdwg.mxu0
    %1012 = vrot.lane.b32.xlu0 %v422, 112
    %v1013 = vpop.permute.xlu0 %1012
    %1014 = vrot.lane.b32.xlu0 %v424, 112
    %v1015 = vpop.permute.xlu0 %1014
    %v1017 = vsel %vm427, %v1013, 0
    %v1020 = vsel %vm427, %v1015, 0
    %1022 = vmatprep.subr.bf16.mxu0 0
    %1023 = vmatpush1.bf16.xpose.msra.mxu0 0
    %1024 = vmatprep.subr.bf16.mxu0 0
    %1025 = vmatpush1.bf16.xpose.msra.mxu0 0
    %1026 = vmatprep.subr.bf16.mxu0 0
    %1027 = vmatpush1.bf16.xpose.msra.mxu0 0
    %1028 = vmatprep.subr.bf16.mxu0 0
    %1029 = vmatpush1.bf16.xpose.msra.mxu0 0
    %1030 = vmatprep.subr.bf16.mxu0 0
    %1031 = vmatpush1.bf16.xpose.msra.mxu0 0
    %1032 = vmatprep.subr.bf16.mxu0 0
    %1033 = vmatpush1.bf16.xpose.msra.mxu0 0
    %1034 = vmatprep.subr.bf16.mxu0 0
    %1035 = vmatpush1.bf16.xpose.msra.mxu0 0
    %1036 = vmatprep.subr.bf16.mxu0 0
    %1037 = vmatpush1.bf16.xpose.msra.mxu0 %v1020
    %1038 = vmatprep.subr.bf16.mxu0 0
    %1039 = vmatpush2.bf16.xpose.msra.mxu0 0
    %1040 = vmatprep.subr.bf16.mxu0 0
    %1041 = vmatpush2.bf16.xpose.msra.mxu0 0
    %1042 = vmatprep.subr.bf16.mxu0 0
    %1043 = vmatpush2.bf16.xpose.msra.mxu0 0
    %1044 = vmatprep.subr.bf16.mxu0 0
    %1045 = vmatpush2.bf16.xpose.msra.mxu0 0
    %1046 = vmatprep.subr.bf16.mxu0 0
    %1047 = vmatpush2.bf16.xpose.msra.mxu0 0
    %1048 = vmatprep.subr.bf16.mxu0 0
    %1049 = vmatpush2.bf16.xpose.msra.mxu0 0
    %1050 = vmatprep.subr.bf16.mxu0 0
    %1051 = vmatpush2.bf16.xpose.msra.mxu0 0
    %1052 = vmatprep.subr.bf16.mxu0 0
    %1053 = vmatpush2.bf16.xpose.msra.mxu0 0
    %1054 = vmatprep.mubr.bf16.mxu0 0
    %1055 = vmatmul.mubr.bf16.gmra.mxu0 %v1017
    %v1056 = vpop.f32.mrf.mxu0
    %v1057 = vadd.f32 0.0, %v1056
    %v1058 = vpop.f32.mrf.mxu0
    %v1059 = vpop.f32.mrf.mxu0
    %v1060 = vpop.f32.mrf.mxu0
    %1061 = vdwg.mxu0
    %v1062 = vsel %vm427, %v1007, -inf
    %1063 = vmax.xlane.f32.xlu0 %v1062
    %v1064 = vpop.xlane.xlu0 %1063
    %v1065 = vsel %vm427, %v1057, -inf
    %1066 = vmax.xlane.f32.xlu0 %v1065
    %v1067 = vpop.xlane.xlu0 %1066
    %v1068 = vsub.f32 %v1007, %v1064
    %v1069 = vsub.f32 %v1057, %v1067
    %v1070 = vmul.f32 %v1068, 1.442695
    %v1071 = vpow.pop %v1070
    %v1072 = vmul.f32 %v1069, 1.442695
    %v1073 = vpow.pop %v1072
    %v1074 = vsel %vm427, %v1071, 0.0
    %1075 = vadd.xlane.f32.xlu0 %v1074
    %v1076 = vpop.xlane.xlu0 %1075
    %v1077 = vsel %vm427, %v1073, 0.0
    %1078 = vadd.xlane.f32.xlu0 %v1077
    %v1079 = vpop.xlane.xlu0 %1078
    %v1080 = vrcp.pop %v1076
    %v1081 = vrcp.pop %v1079
    %v1082 = vmul.f32 %v1071, %v1080
    %v1083 = vmul.f32 %v1073, %v1081
    %v1084 = vpack.c.bf16 %v1082, %v1082
    %v1085 = vpack.c.bf16 %v1083, %v1083
    %1086 = vrot.lane.b32.xlu0 %v425, 112
    %v1087 = vpop.permute.xlu0 %1086
    %v1089 = vsel %vm427, %v1084, 0
    %v1092 = vsel %vm547, %v1087, 0
    %1094 = vmatprep.subr.bf16.mxu0 0
    %1095 = vmatpush1.bf16.msra.mxu0 0
    %1096 = vmatprep.subr.bf16.mxu0 0
    %1097 = vmatpush1.bf16.msra.mxu0 0
    %1098 = vmatprep.subr.bf16.mxu0 0
    %1099 = vmatpush1.bf16.msra.mxu0 0
    %1100 = vmatprep.subr.bf16.mxu0 0
    %1101 = vmatpush1.bf16.msra.mxu0 0
    %1102 = vmatprep.subr.bf16.mxu0 0
    %1103 = vmatpush1.bf16.msra.mxu0 0
    %1104 = vmatprep.subr.bf16.mxu0 0
    %1105 = vmatpush1.bf16.msra.mxu0 0
    %1106 = vmatprep.subr.bf16.mxu0 0
    %1107 = vmatpush1.bf16.msra.mxu0 0
    %1108 = vmatprep.subr.bf16.mxu0 0
    %1109 = vmatpush1.bf16.msra.mxu0 %v1092
    %1110 = vmatprep.subr.bf16.mxu0 0
    %1111 = vmatpush2.bf16.msra.mxu0 0
    %1112 = vmatprep.subr.bf16.mxu0 0
    %1113 = vmatpush2.bf16.msra.mxu0 0
    %1114 = vmatprep.subr.bf16.mxu0 0
    %1115 = vmatpush2.bf16.msra.mxu0 0
    %1116 = vmatprep.subr.bf16.mxu0 0
    %1117 = vmatpush2.bf16.msra.mxu0 0
    %1118 = vmatprep.subr.bf16.mxu0 0
    %1119 = vmatpush2.bf16.msra.mxu0 0
    %1120 = vmatprep.subr.bf16.mxu0 0
    %1121 = vmatpush2.bf16.msra.mxu0 0
    %1122 = vmatprep.subr.bf16.mxu0 0
    %1123 = vmatpush2.bf16.msra.mxu0 0
    %1124 = vmatprep.subr.bf16.mxu0 0
    %1125 = vmatpush2.bf16.msra.mxu0 0
    %1126 = vmatprep.mubr.bf16.mxu0 0
    %1127 = vmatmul.mubr.bf16.gmra.mxu0 %v1089
    %v1128 = vpop.f32.mrf.mxu0
    %v1129 = vadd.f32 0.0, %v1128
    %v1130 = vpop.f32.mrf.mxu0
    %v1131 = vpop.f32.mrf.mxu0
    %v1132 = vpop.f32.mrf.mxu0
    %1133 = vdwg.mxu0
    %1134 = vrot.lane.b32.xlu0 %v426, 112
    %v1135 = vpop.permute.xlu0 %1134
    %v1137 = vsel %vm427, %v1085, 0
    %v1140 = vsel %vm547, %v1135, 0
    %1142 = vmatprep.subr.bf16.mxu0 0
    %1143 = vmatpush1.bf16.msra.mxu0 0
    %1144 = vmatprep.subr.bf16.mxu0 0
    %1145 = vmatpush1.bf16.msra.mxu0 0
    %1146 = vmatprep.subr.bf16.mxu0 0
    %1147 = vmatpush1.bf16.msra.mxu0 0
    %1148 = vmatprep.subr.bf16.mxu0 0
    %1149 = vmatpush1.bf16.msra.mxu0 0
    %1150 = vmatprep.subr.bf16.mxu0 0
    %1151 = vmatpush1.bf16.msra.mxu0 0
    %1152 = vmatprep.subr.bf16.mxu0 0
    %1153 = vmatpush1.bf16.msra.mxu0 0
    %1154 = vmatprep.subr.bf16.mxu0 0
    %1155 = vmatpush1.bf16.msra.mxu0 0
    %1156 = vmatprep.subr.bf16.mxu0 0
    %1157 = vmatpush1.bf16.msra.mxu0 %v1140
    %1158 = vmatprep.subr.bf16.mxu0 0
    %1159 = vmatpush2.bf16.msra.mxu0 0
    %1160 = vmatprep.subr.bf16.mxu0 0
    %1161 = vmatpush2.bf16.msra.mxu0 0
    %1162 = vmatprep.subr.bf16.mxu0 0
    %1163 = vmatpush2.bf16.msra.mxu0 0
    %1164 = vmatprep.subr.bf16.mxu0 0
    %1165 = vmatpush2.bf16.msra.mxu0 0
    %1166 = vmatprep.subr.bf16.mxu0 0
    %1167 = vmatpush2.bf16.msra.mxu0 0
    %1168 = vmatprep.subr.bf16.mxu0 0
    %1169 = vmatpush2.bf16.msra.mxu0 0
    %1170 = vmatprep.subr.bf16.mxu0 0
    %1171 = vmatpush2.bf16.msra.mxu0 0
    %1172 = vmatprep.subr.bf16.mxu0 0
    %1173 = vmatpush2.bf16.msra.mxu0 0
    %1174 = vmatprep.mubr.bf16.mxu0 0
    %1175 = vmatmul.mubr.bf16.gmra.mxu0 %v1137
    %v1176 = vpop.f32.mrf.mxu0
    %v1177 = vadd.f32 0.0, %v1176
    %v1178 = vpop.f32.mrf.mxu0
    %v1179 = vpop.f32.mrf.mxu0
    %v1180 = vpop.f32.mrf.mxu0
    %1181 = vdwg.mxu0
    %v1182 = vpack.c.bf16 %v1177, %v1129
    %s1183 = scalar_lea.vmem [#allocation10], 8
    %v1184 = vld [vmem:[%s1183] sm:$0xf]
    %v1186 = vsel %vm427, %v1182, 0
    %v1189 = vsel %vm547, %v1184, 0
    %1191 = vmatprep.subr.bf16.mxu0 0
    %1192 = vmatpush1.bf16.msra.mxu0 0
    %1193 = vmatprep.subr.bf16.mxu0 0
    %1194 = vmatpush1.bf16.msra.mxu0 0
    %1195 = vmatprep.subr.bf16.mxu0 0
    %1196 = vmatpush1.bf16.msra.mxu0 0
    %1197 = vmatprep.subr.bf16.mxu0 0
    %1198 = vmatpush1.bf16.msra.mxu0 0
    %1199 = vmatprep.subr.bf16.mxu0 0
    %1200 = vmatpush1.bf16.msra.mxu0 0
    %1201 = vmatprep.subr.bf16.mxu0 0
    %1202 = vmatpush1.bf16.msra.mxu0 0
    %1203 = vmatprep.subr.bf16.mxu0 0
    %1204 = vmatpush1.bf16.msra.mxu0 0
    %1205 = vmatprep.subr.bf16.mxu0 0
    %1206 = vmatpush1.bf16.msra.mxu0 %v1189
    %1207 = vmatprep.subr.bf16.mxu0 0
    %1208 = vmatpush2.bf16.msra.mxu0 0
    %1209 = vmatprep.subr.bf16.mxu0 0
    %1210 = vmatpush2.bf16.msra.mxu0 0
    %1211 = vmatprep.subr.bf16.mxu0 0
    %1212 = vmatpush2.bf16.msra.mxu0 0
    %1213 = vmatprep.subr.bf16.mxu0 0
    %1214 = vmatpush2.bf16.msra.mxu0 0
    %1215 = vmatprep.subr.bf16.mxu0 0
    %1216 = vmatpush2.bf16.msra.mxu0 0
    %1217 = vmatprep.subr.bf16.mxu0 0
    %1218 = vmatpush2.bf16.msra.mxu0 0
    %1219 = vmatprep.subr.bf16.mxu0 0
    %1220 = vmatpush2.bf16.msra.mxu0 0
    %1221 = vmatprep.subr.bf16.mxu0 0
    %1222 = vmatpush2.bf16.msra.mxu0 0
    %1223 = vmatprep.mubr.bf16.mxu0 0
    %1224 = vmatmul.mubr.bf16.gmra.mxu0 %v1186
    %v1225 = vpop.f32.mrf.mxu0
    %v1226 = vadd.f32 0.0, %v1225
    %v1227 = vpop.f32.mrf.mxu0
    %v1228 = vpop.f32.mrf.mxu0
    %v1229 = vadd.f32 0.0, %v1228
    %v1230 = vpop.f32.mrf.mxu0
    %1231 = vdwg.mxu0
    %v1232 = vadd.f32 %v956, %v1226
    %v1233 = vadd.f32 %v959, %v1229
    %1234 = vrot.lane.b32.xlu0 %v421, 104
    %v1235 = vpop.permute.xlu0 %1234
    %1236 = vrot.lane.b32.xlu0 %v423, 104
    %v1237 = vpop.permute.xlu0 %1236
    %v1239 = vsel %vm427, %v1235, 0
    %v1242 = vsel %vm427, %v1237, 0
    %1244 = vmatprep.subr.bf16.mxu0 0
    %1245 = vmatpush1.bf16.xpose.msra.mxu0 0
    %1246 = vmatprep.subr.bf16.mxu0 0
    %1247 = vmatpush1.bf16.xpose.msra.mxu0 0
    %1248 = vmatprep.subr.bf16.mxu0 0
    %1249 = vmatpush1.bf16.xpose.msra.mxu0 0
    %1250 = vmatprep.subr.bf16.mxu0 0
    %1251 = vmatpush1.bf16.xpose.msra.mxu0 0
    %1252 = vmatprep.subr.bf16.mxu0 0
    %1253 = vmatpush1.bf16.xpose.msra.mxu0 0
    %1254 = vmatprep.subr.bf16.mxu0 0
    %1255 = vmatpush1.bf16.xpose.msra.mxu0 0
    %1256 = vmatprep.subr.bf16.mxu0 0
    %1257 = vmatpush1.bf16.xpose.msra.mxu0 0
    %1258 = vmatprep.subr.bf16.mxu0 0
    %1259 = vmatpush1.bf16.xpose.msra.mxu0 %v1242
    %1260 = vmatprep.subr.bf16.mxu0 0
    %1261 = vmatpush2.bf16.xpose.msra.mxu0 0
    %1262 = vmatprep.subr.bf16.mxu0 0
    %1263 = vmatpush2.bf16.xpose.msra.mxu0 0
    %1264 = vmatprep.subr.bf16.mxu0 0
    %1265 = vmatpush2.bf16.xpose.msra.mxu0 0
    %1266 = vmatprep.subr.bf16.mxu0 0
    %1267 = vmatpush2.bf16.xpose.msra.mxu0 0
    %1268 = vmatprep.subr.bf16.mxu0 0
    %1269 = vmatpush2.bf16.xpose.msra.mxu0 0
    %1270 = vmatprep.subr.bf16.mxu0 0
    %1271 = vmatpush2.bf16.xpose.msra.mxu0 0
    %1272 = vmatprep.subr.bf16.mxu0 0
    %1273 = vmatpush2.bf16.xpose.msra.mxu0 0
    %1274 = vmatprep.subr.bf16.mxu0 0
    %1275 = vmatpush2.bf16.xpose.msra.mxu0 0
    %1276 = vmatprep.mubr.bf16.mxu0 0
    %1277 = vmatmul.mubr.bf16.gmra.mxu0 %v1239
    %v1278 = vpop.f32.mrf.mxu0
    %v1279 = vadd.f32 0.0, %v1278
    %v1280 = vpop.f32.mrf.mxu0
    %v1281 = vpop.f32.mrf.mxu0
    %v1282 = vpop.f32.mrf.mxu0
    %1283 = vdwg.mxu0
    %1284 = vrot.lane.b32.xlu0 %v422, 104
    %v1285 = vpop.permute.xlu0 %1284
    %1286 = vrot.lane.b32.xlu0 %v424, 104
    %v1287 = vpop.permute.xlu0 %1286
    %v1289 = vsel %vm427, %v1285, 0
    %v1292 = vsel %vm427, %v1287, 0
    %1294 = vmatprep.subr.bf16.mxu0 0
    %1295 = vmatpush1.bf16.xpose.msra.mxu0 0
    %1296 = vmatprep.subr.bf16.mxu0 0
    %1297 = vmatpush1.bf16.xpose.msra.mxu0 0
    %1298 = vmatprep.subr.bf16.mxu0 0
    %1299 = vmatpush1.bf16.xpose.msra.mxu0 0
    %1300 = vmatprep.subr.bf16.mxu0 0
    %1301 = vmatpush1.bf16.xpose.msra.mxu0 0
    %1302 = vmatprep.subr.bf16.mxu0 0
    %1303 = vmatpush1.bf16.xpose.msra.mxu0 0
    %1304 = vmatprep.subr.bf16.mxu0 0
    %1305 = vmatpush1.bf16.xpose.msra.mxu0 0
    %1306 = vmatprep.subr.bf16.mxu0 0
    %1307 = vmatpush1.bf16.xpose.msra.mxu0 0
    %1308 = vmatprep.subr.bf16.mxu0 0
    %1309 = vmatpush1.bf16.xpose.msra.mxu0 %v1292
    %1310 = vmatprep.subr.bf16.mxu0 0
    %1311 = vmatpush2.bf16.xpose.msra.mxu0 0
    %1312 = vmatprep.subr.bf16.mxu0 0
    %1313 = vmatpush2.bf16.xpose.msra.mxu0 0
    %1314 = vmatprep.subr.bf16.mxu0 0
    %1315 = vmatpush2.bf16.xpose.msra.mxu0 0
    %1316 = vmatprep.subr.bf16.mxu0 0
    %1317 = vmatpush2.bf16.xpose.msra.mxu0 0
    %1318 = vmatprep.subr.bf16.mxu0 0
    %1319 = vmatpush2.bf16.xpose.msra.mxu0 0
    %1320 = vmatprep.subr.bf16.mxu0 0
    %1321 = vmatpush2.bf16.xpose.msra.mxu0 0
    %1322 = vmatprep.subr.bf16.mxu0 0
    %1323 = vmatpush2.bf16.xpose.msra.mxu0 0
    %1324 = vmatprep.subr.bf16.mxu0 0
    %1325 = vmatpush2.bf16.xpose.msra.mxu0 0
    %1326 = vmatprep.mubr.bf16.mxu0 0
    %1327 = vmatmul.mubr.bf16.gmra.mxu0 %v1289
    %v1328 = vpop.f32.mrf.mxu0
    %v1329 = vadd.f32 0.0, %v1328
    %v1330 = vpop.f32.mrf.mxu0
    %v1331 = vpop.f32.mrf.mxu0
    %v1332 = vpop.f32.mrf.mxu0
    %1333 = vdwg.mxu0
    %v1334 = vsel %vm427, %v1279, -inf
    %1335 = vmax.xlane.f32.xlu0 %v1334
    %v1336 = vpop.xlane.xlu0 %1335
    %v1337 = vsel %vm427, %v1329, -inf
    %1338 = vmax.xlane.f32.xlu0 %v1337
    %v1339 = vpop.xlane.xlu0 %1338
    %v1340 = vsub.f32 %v1279, %v1336
    %v1341 = vsub.f32 %v1329, %v1339
    %v1342 = vmul.f32 %v1340, 1.442695
    %v1343 = vpow.pop %v1342
    %v1344 = vmul.f32 %v1341, 1.442695
    %v1345 = vpow.pop %v1344
    %v1346 = vsel %vm427, %v1343, 0.0
    %1347 = vadd.xlane.f32.xlu0 %v1346
    %v1348 = vpop.xlane.xlu0 %1347
    %v1349 = vsel %vm427, %v1345, 0.0
    %1350 = vadd.xlane.f32.xlu0 %v1349
    %v1351 = vpop.xlane.xlu0 %1350
    %v1352 = vrcp.pop %v1348
    %v1353 = vrcp.pop %v1351
    %v1354 = vmul.f32 %v1343, %v1352
    %v1355 = vmul.f32 %v1345, %v1353
    %v1356 = vpack.c.bf16 %v1354, %v1354
    %v1357 = vpack.c.bf16 %v1355, %v1355
    %1358 = vrot.lane.b32.xlu0 %v425, 104
    %v1359 = vpop.permute.xlu0 %1358
    %v1361 = vsel %vm427, %v1356, 0
    %v1364 = vsel %vm547, %v1359, 0
    %1366 = vmatprep.subr.bf16.mxu0 0
    %1367 = vmatpush1.bf16.msra.mxu0 0
    %1368 = vmatprep.subr.bf16.mxu0 0
    %1369 = vmatpush1.bf16.msra.mxu0 0
    %1370 = vmatprep.subr.bf16.mxu0 0
    %1371 = vmatpush1.bf16.msra.mxu0 0
    %1372 = vmatprep.subr.bf16.mxu0 0
    %1373 = vmatpush1.bf16.msra.mxu0 0
    %1374 = vmatprep.subr.bf16.mxu0 0
    %1375 = vmatpush1.bf16.msra.mxu0 0
    %1376 = vmatprep.subr.bf16.mxu0 0
    %1377 = vmatpush1.bf16.msra.mxu0 0
    %1378 = vmatprep.subr.bf16.mxu0 0
    %1379 = vmatpush1.bf16.msra.mxu0 0
    %1380 = vmatprep.subr.bf16.mxu0 0
    %1381 = vmatpush1.bf16.msra.mxu0 %v1364
    %1382 = vmatprep.subr.bf16.mxu0 0
    %1383 = vmatpush2.bf16.msra.mxu0 0
    %1384 = vmatprep.subr.bf16.mxu0 0
    %1385 = vmatpush2.bf16.msra.mxu0 0
    %1386 = vmatprep.subr.bf16.mxu0 0
    %1387 = vmatpush2.bf16.msra.mxu0 0
    %1388 = vmatprep.subr.bf16.mxu0 0
    %1389 = vmatpush2.bf16.msra.mxu0 0
    %1390 = vmatprep.subr.bf16.mxu0 0
    %1391 = vmatpush2.bf16.msra.mxu0 0
    %1392 = vmatprep.subr.bf16.mxu0 0
    %1393 = vmatpush2.bf16.msra.mxu0 0
    %1394 = vmatprep.subr.bf16.mxu0 0
    %1395 = vmatpush2.bf16.msra.mxu0 0
    %1396 = vmatprep.subr.bf16.mxu0 0
    %1397 = vmatpush2.bf16.msra.mxu0 0
    %1398 = vmatprep.mubr.bf16.mxu0 0
    %1399 = vmatmul.mubr.bf16.gmra.mxu0 %v1361
    %v1400 = vpop.f32.mrf.mxu0
    %v1401 = vadd.f32 0.0, %v1400
    %v1402 = vpop.f32.mrf.mxu0
    %v1403 = vpop.f32.mrf.mxu0
    %v1404 = vpop.f32.mrf.mxu0
    %1405 = vdwg.mxu0
    %1406 = vrot.lane.b32.xlu0 %v426, 104
    %v1407 = vpop.permute.xlu0 %1406
    %v1409 = vsel %vm427, %v1357, 0
    %v1412 = vsel %vm547, %v1407, 0
    %1414 = vmatprep.subr.bf16.mxu0 0
    %1415 = vmatpush1.bf16.msra.mxu0 0
    %1416 = vmatprep.subr.bf16.mxu0 0
    %1417 = vmatpush1.bf16.msra.mxu0 0
    %1418 = vmatprep.subr.bf16.mxu0 0
    %1419 = vmatpush1.bf16.msra.mxu0 0
    %1420 = vmatprep.subr.bf16.mxu0 0
    %1421 = vmatpush1.bf16.msra.mxu0 0
    %1422 = vmatprep.subr.bf16.mxu0 0
    %1423 = vmatpush1.bf16.msra.mxu0 0
    %1424 = vmatprep.subr.bf16.mxu0 0
    %1425 = vmatpush1.bf16.msra.mxu0 0
    %1426 = vmatprep.subr.bf16.mxu0 0
    %1427 = vmatpush1.bf16.msra.mxu0 0
    %1428 = vmatprep.subr.bf16.mxu0 0
    %1429 = vmatpush1.bf16.msra.mxu0 %v1412
    %1430 = vmatprep.subr.bf16.mxu0 0
    %1431 = vmatpush2.bf16.msra.mxu0 0
    %1432 = vmatprep.subr.bf16.mxu0 0
    %1433 = vmatpush2.bf16.msra.mxu0 0
    %1434 = vmatprep.subr.bf16.mxu0 0
    %1435 = vmatpush2.bf16.msra.mxu0 0
    %1436 = vmatprep.subr.bf16.mxu0 0
    %1437 = vmatpush2.bf16.msra.mxu0 0
    %1438 = vmatprep.subr.bf16.mxu0 0
    %1439 = vmatpush2.bf16.msra.mxu0 0
    %1440 = vmatprep.subr.bf16.mxu0 0
    %1441 = vmatpush2.bf16.msra.mxu0 0
    %1442 = vmatprep.subr.bf16.mxu0 0
    %1443 = vmatpush2.bf16.msra.mxu0 0
    %1444 = vmatprep.subr.bf16.mxu0 0
    %1445 = vmatpush2.bf16.msra.mxu0 0
    %1446 = vmatprep.mubr.bf16.mxu0 0
    %1447 = vmatmul.mubr.bf16.gmra.mxu0 %v1409
    %v1448 = vpop.f32.mrf.mxu0
    %v1449 = vadd.f32 0.0, %v1448
    %v1450 = vpop.f32.mrf.mxu0
    %v1451 = vpop.f32.mrf.mxu0
    %v1452 = vpop.f32.mrf.mxu0
    %1453 = vdwg.mxu0
    %v1454 = vpack.c.bf16 %v1449, %v1401
    %s1455 = scalar_lea.vmem [#allocation10], 12
    %v1456 = vld [vmem:[%s1455] sm:$0xf]
    %v1458 = vsel %vm427, %v1454, 0
    %v1461 = vsel %vm547, %v1456, 0
    %1463 = vmatprep.subr.bf16.mxu0 0
    %1464 = vmatpush1.bf16.msra.mxu0 0
    %1465 = vmatprep.subr.bf16.mxu0 0
    %1466 = vmatpush1.bf16.msra.mxu0 0
    %1467 = vmatprep.subr.bf16.mxu0 0
    %1468 = vmatpush1.bf16.msra.mxu0 0
    %1469 = vmatprep.subr.bf16.mxu0 0
    %1470 = vmatpush1.bf16.msra.mxu0 0
    %1471 = vmatprep.subr.bf16.mxu0 0
    %1472 = vmatpush1.bf16.msra.mxu0 0
    %1473 = vmatprep.subr.bf16.mxu0 0
    %1474 = vmatpush1.bf16.msra.mxu0 0
    %1475 = vmatprep.subr.bf16.mxu0 0
    %1476 = vmatpush1.bf16.msra.mxu0 0
    %1477 = vmatprep.subr.bf16.mxu0 0
    %1478 = vmatpush1.bf16.msra.mxu0 %v1461
    %1479 = vmatprep.subr.bf16.mxu0 0
    %1480 = vmatpush2.bf16.msra.mxu0 0
    %1481 = vmatprep.subr.bf16.mxu0 0
    %1482 = vmatpush2.bf16.msra.mxu0 0
    %1483 = vmatprep.subr.bf16.mxu0 0
    %1484 = vmatpush2.bf16.msra.mxu0 0
    %1485 = vmatprep.subr.bf16.mxu0 0
    %1486 = vmatpush2.bf16.msra.mxu0 0
    %1487 = vmatprep.subr.bf16.mxu0 0
    %1488 = vmatpush2.bf16.msra.mxu0 0
    %1489 = vmatprep.subr.bf16.mxu0 0
    %1490 = vmatpush2.bf16.msra.mxu0 0
    %1491 = vmatprep.subr.bf16.mxu0 0
    %1492 = vmatpush2.bf16.msra.mxu0 0
    %1493 = vmatprep.subr.bf16.mxu0 0
    %1494 = vmatpush2.bf16.msra.mxu0 0
    %1495 = vmatprep.mubr.bf16.mxu0 0
    %1496 = vmatmul.mubr.bf16.gmra.mxu0 %v1458
    %v1497 = vpop.f32.mrf.mxu0
    %v1498 = vadd.f32 0.0, %v1497
    %v1499 = vpop.f32.mrf.mxu0
    %v1500 = vpop.f32.mrf.mxu0
    %v1501 = vadd.f32 0.0, %v1500
    %v1502 = vpop.f32.mrf.mxu0
    %1503 = vdwg.mxu0
    %v1504 = vadd.f32 %v1232, %v1498
    %v1505 = vadd.f32 %v1233, %v1501
    %v1506 = vadd.f32 %v182, %v1504
    %v1507 = vadd.f32 %v183, %v1505
    %v1508 = vld [vmem:[%s17] sm:$0x1]
    %v1509 = vld [vmem:[%s18] sm:$0x1]
    %v1510 = vsel %vm186, %v1506, 0.0
    %1511 = vadd.xlane.f32.xlu0 %v1510
    %v1512 = vpop.xlane.xlu0 %1511
    %v1513 = vsel %vm186, %v1507, 0.0
    %1514 = vadd.xlane.f32.xlu0 %v1513
    %v1515 = vpop.xlane.xlu0 %1514
    %v1516 = vmul.f32 %v1512, %v193
    %v1517 = vmul.f32 %v1515, %v193
    %v1518 = vsub.f32 %v1506, %v1516
    %v1519 = vsub.f32 %v1507, %v1517
    %v1520 = vmul.f32 %v1518, %v1518
    %v1521 = vmul.f32 %v1519, %v1519
    %v1522 = vsel %vm186, %v1520, 0.0
    %1523 = vadd.xlane.f32.xlu0 %v1522
    %v1524 = vpop.xlane.xlu0 %1523
    %v1525 = vsel %vm186, %v1521, 0.0
    %1526 = vadd.xlane.f32.xlu0 %v1525
    %v1527 = vpop.xlane.xlu0 %1526
    %v1528 = vmul.f32 %v1524, 0.032258064
    %v1529 = vmul.f32 %v1527, 0.032258064
    %v1530 = vrsqrt.pop %v1528
    %v1531 = vmul.f32 %v1528, %v1530
    %vm1532 = vcmp.eq.f32.partialorder %v1528, inf
    %v1533 = vsel %vm1532, %v1528, %v1531
    %vm1534 = vcmp.eq.f32.partialorder %v1528, 0.0
    %v1535 = vand.u32 %v1528, 2147483648
    %v1536 = vsel %vm1534, %v1535, %v1533
    %v1537 = vrsqrt.pop %v1529
    %v1538 = vmul.f32 %v1529, %v1537
    %vm1539 = vcmp.eq.f32.partialorder %v1529, inf
    %v1540 = vsel %vm1539, %v1529, %v1538
    %vm1541 = vcmp.eq.f32.partialorder %v1529, 0.0
    %v1542 = vand.u32 %v1529, 2147483648
    %v1543 = vsel %vm1541, %v1542, %v1540
    %v1544 = vadd.f32 %v1536, 1e-06
    %v1545 = vadd.f32 %v1543, 1e-06
    %v1546 = vrcp.pop %v1544
    %v1547 = vrcp.pop %v1545
    %v1549 = vlaneseq
    %v1550 = vshrl.u32 %v1549, 7
    %v1551 = vsub.s32 0, %v1550
    %v1552 = vrot.slane %v1508, %v1551
    %v1554 = vmul.f32 %v1552, %v1518
    %v1555 = vmul.f32 %v1552, %v1519
    %v1556 = vmul.f32 %v1554, %v1546
    %v1557 = vmul.f32 %v1555, %v1547
    %v1559 = vlaneseq
    %v1560 = vshrl.u32 %v1559, 7
    %v1561 = vsub.s32 0, %v1560
    %v1562 = vrot.slane %v1509, %v1561
    %v1564 = vadd.f32 %v1556, %v1562
    %v1565 = vadd.f32 %v1557, %v1562
    %v1566 = vpack.c.bf16 %v1565, %v1564
    %v1567 = vld [vmem:[#allocation11] sm:$0xf]
    %v1568 = vld [vmem:[#allocation11 + $0x4] sm:$0xf]
    %v1569 = vld [vmem:[#allocation11 + $0x8] sm:$0xf]
    %v1570 = vld [vmem:[#allocation11 + $0xc] sm:$0xf]
    %v1571 = vld [vmem:[#allocation13] sm:$0x1]
    %v1573 = vlaneseq
    %v1574 = vshrl.u32 %v1573, 7
    %v1575 = vsub.s32 0, %v1574
    %v1576 = vrot.slane %v1571, %v1575
    %v1582 = vunpack.c.l.b16 %v1567
    %v1583 = vunpack.c.l.b16 %v1568
    %v1584 = vunpack.c.l.b16 %v1569
    %v1585 = vunpack.c.l.b16 %v1570
    %v1586 = vpack.c.b16 %v1583, %v1582
    %v1587 = vpack.c.b16 %v1585, %v1584
    %v1591 = vsel %vm186, %v1566, 0
    %1593 = vmatprep.subr.bf16.mxu0 0
    %1594 = vmatpush1.bf16.msra.mxu0 0
    %1595 = vmatprep.subr.bf16.mxu0 0
    %1596 = vmatpush1.bf16.msra.mxu0 0
    %1597 = vmatprep.subr.bf16.mxu0 0
    %1598 = vmatpush1.bf16.msra.mxu0 0
    %1599 = vmatprep.subr.bf16.mxu0 0
    %1600 = vmatpush1.bf16.msra.mxu0 0
    %1601 = vmatprep.subr.bf16.mxu0 0
    %1602 = vmatpush1.bf16.msra.mxu0 0
    %1603 = vmatprep.subr.bf16.mxu0 0
    %1604 = vmatpush1.bf16.msra.mxu0 0
    %1605 = vmatprep.subr.bf16.mxu0 0
    %1606 = vmatpush1.bf16.msra.mxu0 %v1587
    %1607 = vmatprep.subr.bf16.mxu0 0
    %1608 = vmatpush1.bf16.msra.mxu0 %v1586
    %1609 = vmatprep.subr.bf16.mxu0 0
    %1610 = vmatpush2.bf16.msra.mxu0 0
    %1611 = vmatprep.subr.bf16.mxu0 0
    %1612 = vmatpush2.bf16.msra.mxu0 0
    %1613 = vmatprep.subr.bf16.mxu0 0
    %1614 = vmatpush2.bf16.msra.mxu0 0
    %1615 = vmatprep.subr.bf16.mxu0 0
    %1616 = vmatpush2.bf16.msra.mxu0 0
    %1617 = vmatprep.subr.bf16.mxu0 0
    %1618 = vmatpush2.bf16.msra.mxu0 0
    %1619 = vmatprep.subr.bf16.mxu0 0
    %1620 = vmatpush2.bf16.msra.mxu0 0
    %1621 = vmatprep.subr.bf16.mxu0 0
    %1622 = vmatpush2.bf16.msra.mxu0 0
    %1623 = vmatprep.subr.bf16.mxu0 0
    %1624 = vmatpush2.bf16.msra.mxu0 0
    %1625 = vmatprep.mubr.bf16.mxu0 0
    %1626 = vmatmul.mubr.bf16.gmra.mxu0 %v1591
    %v1627 = vpop.f32.mrf.mxu0
    %v1628 = vadd.f32 %v1576, %v1627
    %v1629 = vpop.f32.mrf.mxu0
    %v1630 = vpop.f32.mrf.mxu0
    %v1631 = vadd.f32 %v1576, %v1630
    %v1632 = vpop.f32.mrf.mxu0
    %1633 = vdwg.mxu0
    %v1634 = vmax.f32 %v1628, 0.0
    %v1635 = vmax.f32 %v1631, 0.0
    %v1636 = vpack.c.bf16 %v1635, %v1634
    %v1637 = vld [vmem:[%s7] sm:$0xf]
    %v1638 = vld [vmem:[%s7 + $0x4] sm:$0xf]
    %v1639 = vld [vmem:[%s7 + $0x8] sm:$0xf]
    %v1640 = vld [vmem:[%s7 + $0xc] sm:$0xf]
    %v1641 = vld [vmem:[%s7 + $0x10] sm:$0xf]
    %v1642 = vld [vmem:[%s7 + $0x14] sm:$0xf]
    %v1643 = vld [vmem:[%s7 + $0x18] sm:$0xf]
    %v1644 = vld [vmem:[%s7 + $0x1c] sm:$0xf]
    %v1645 = vld [vmem:[#allocation14] sm:$0x1]
    %v1647 = vlaneseq
    %v1648 = vshrl.u32 %v1647, 7
    %v1649 = vsub.s32 0, %v1648
    %v1650 = vrot.slane %v1645, %v1649
    %v1660 = vunpack.c.l.b16 %v1637
    %v1661 = vunpack.c.l.b16 %v1638
    %v1662 = vunpack.c.l.b16 %v1639
    %v1663 = vunpack.c.l.b16 %v1640
    %v1664 = vunpack.c.l.b16 %v1641
    %v1665 = vunpack.c.l.b16 %v1642
    %v1666 = vunpack.c.l.b16 %v1643
    %v1667 = vunpack.c.l.b16 %v1644
    %v1668 = vpack.c.b16 %v1661, %v1660
    %v1669 = vpack.c.b16 %v1663, %v1662
    %v1670 = vpack.c.b16 %v1665, %v1664
    %v1671 = vpack.c.b16 %v1667, %v1666
    %vm1676 = vcmask 523264
    %v1678 = vsel %vm1676, %v1636, 0
    %1680 = vmatprep.subr.bf16.mxu0 0
    %1681 = vmatpush1.bf16.msra.mxu0 0
    %1682 = vmatprep.subr.bf16.mxu0 0
    %1683 = vmatpush1.bf16.msra.mxu0 0
    %1684 = vmatprep.subr.bf16.mxu0 0
    %1685 = vmatpush1.bf16.msra.mxu0 0
    %1686 = vmatprep.subr.bf16.mxu0 0
    %1687 = vmatpush1.bf16.msra.mxu0 0
    %1688 = vmatprep.subr.bf16.mxu0 0
    %1689 = vmatpush1.bf16.msra.mxu0 %v1671
    %1690 = vmatprep.subr.bf16.mxu0 0
    %1691 = vmatpush1.bf16.msra.mxu0 %v1670
    %1692 = vmatprep.subr.bf16.mxu0 0
    %1693 = vmatpush1.bf16.msra.mxu0 %v1669
    %1694 = vmatprep.subr.bf16.mxu0 0
    %1695 = vmatpush1.bf16.msra.mxu0 %v1668
    %1696 = vmatprep.subr.bf16.mxu0 0
    %1697 = vmatpush2.bf16.msra.mxu0 0
    %1698 = vmatprep.subr.bf16.mxu0 0
    %1699 = vmatpush2.bf16.msra.mxu0 0
    %1700 = vmatprep.subr.bf16.mxu0 0
    %1701 = vmatpush2.bf16.msra.mxu0 0
    %1702 = vmatprep.subr.bf16.mxu0 0
    %1703 = vmatpush2.bf16.msra.mxu0 0
    %1704 = vmatprep.subr.bf16.mxu0 0
    %1705 = vmatpush2.bf16.msra.mxu0 0
    %1706 = vmatprep.subr.bf16.mxu0 0
    %1707 = vmatpush2.bf16.msra.mxu0 0
    %1708 = vmatprep.subr.bf16.mxu0 0
    %1709 = vmatpush2.bf16.msra.mxu0 0
    %1710 = vmatprep.subr.bf16.mxu0 0
    %1711 = vmatpush2.bf16.msra.mxu0 0
    %1712 = vmatprep.mubr.bf16.mxu0 0
    %1713 = vmatmul.mubr.bf16.gmra.mxu0 %v1678
    %v1714 = vpop.f32.mrf.mxu0
    %v1715 = vadd.f32 %v1650, %v1714
    %v1716 = vpop.f32.mrf.mxu0
    %v1717 = vpop.f32.mrf.mxu0
    %v1718 = vadd.f32 %v1650, %v1717
    %v1719 = vpop.f32.mrf.mxu0
    %1720 = vdwg.mxu0
    %v1721 = vmax.f32 %v1715, 0.0
    %v1722 = vmax.f32 %v1718, 0.0
    %v1723 = vpack.c.bf16 %v1722, %v1721
    %v1724 = vld [vmem:[%s9] sm:$0xf]
    %v1725 = vld [vmem:[%s9 + $0x4] sm:$0xf]
    %v1726 = vld [vmem:[%s9 + $0x8] sm:$0xf]
    %v1727 = vld [vmem:[%s9 + $0xc] sm:$0xf]
    %v1728 = vld [vmem:[%s9 + $0x10] sm:$0xf]
    %v1729 = vld [vmem:[%s9 + $0x14] sm:$0xf]
    %v1730 = vld [vmem:[%s9 + $0x18] sm:$0xf]
    %v1731 = vld [vmem:[%s9 + $0x1c] sm:$0xf]
    %v1732 = vld [vmem:[%s10] sm:$0x1]
    %v1734 = vlaneseq
    %v1735 = vshrl.u32 %v1734, 7
    %v1736 = vsub.s32 0, %v1735
    %v1737 = vrot.slane %v1732, %v1736
    %v1747 = vunpack.c.l.b16 %v1724
    %v1748 = vunpack.c.l.b16 %v1725
    %v1749 = vunpack.c.l.b16 %v1726
    %v1750 = vunpack.c.l.b16 %v1727
    %v1751 = vunpack.c.l.b16 %v1728
    %v1752 = vunpack.c.l.b16 %v1729
    %v1753 = vunpack.c.l.b16 %v1730
    %v1754 = vunpack.c.l.b16 %v1731
    %v1755 = vpack.c.b16 %v1748, %v1747
    %v1756 = vpack.c.b16 %v1750, %v1749
    %v1757 = vpack.c.b16 %v1752, %v1751
    %v1758 = vpack.c.b16 %v1754, %v1753
    %v1764 = vsel %vm1676, %v1723, 0
    %1766 = vmatprep.subr.bf16.mxu0 0
    %1767 = vmatpush1.bf16.msra.mxu0 0
    %1768 = vmatprep.subr.bf16.mxu0 0
    %1769 = vmatpush1.bf16.msra.mxu0 0
    %1770 = vmatprep.subr.bf16.mxu0 0
    %1771 = vmatpush1.bf16.msra.mxu0 0
    %1772 = vmatprep.subr.bf16.mxu0 0
    %1773 = vmatpush1.bf16.msra.mxu0 0
    %1774 = vmatprep.subr.bf16.mxu0 0
    %1775 = vmatpush1.bf16.msra.mxu0 %v1758
    %1776 = vmatprep.subr.bf16.mxu0 0
    %1777 = vmatpush1.bf16.msra.mxu0 %v1757
    %1778 = vmatprep.subr.bf16.mxu0 0
    %1779 = vmatpush1.bf16.msra.mxu0 %v1756
    %1780 = vmatprep.subr.bf16.mxu0 0
    %1781 = vmatpush1.bf16.msra.mxu0 %v1755
    %1782 = vmatprep.subr.bf16.mxu0 0
    %1783 = vmatpush2.bf16.msra.mxu0 0
    %1784 = vmatprep.subr.bf16.mxu0 0
    %1785 = vmatpush2.bf16.msra.mxu0 0
    %1786 = vmatprep.subr.bf16.mxu0 0
    %1787 = vmatpush2.bf16.msra.mxu0 0
    %1788 = vmatprep.subr.bf16.mxu0 0
    %1789 = vmatpush2.bf16.msra.mxu0 0
    %1790 = vmatprep.subr.bf16.mxu0 0
    %1791 = vmatpush2.bf16.msra.mxu0 0
    %1792 = vmatprep.subr.bf16.mxu0 0
    %1793 = vmatpush2.bf16.msra.mxu0 0
    %1794 = vmatprep.subr.bf16.mxu0 0
    %1795 = vmatpush2.bf16.msra.mxu0 0
    %1796 = vmatprep.subr.bf16.mxu0 0
    %1797 = vmatpush2.bf16.msra.mxu0 0
    %1798 = vmatprep.mubr.bf16.mxu0 0
    %1799 = vmatmul.mubr.bf16.gmra.mxu0 %v1764
    %v1800 = vpop.f32.mrf.mxu0
    %v1801 = vadd.f32 %v1737, %v1800
    %v1802 = vpop.f32.mrf.mxu0
    %v1803 = vpop.f32.mrf.mxu0
    %v1804 = vadd.f32 %v1737, %v1803
    %v1805 = vpop.f32.mrf.mxu0
    %1806 = vdwg.mxu0
    %v1807 = vmax.f32 %v1801, 0.0
    %v1808 = vmax.f32 %v1804, 0.0
    %v1809 = vpack.c.bf16 %v1808, %v1807
    %v1810 = vld [vmem:[#allocation16] sm:$0xf]
    %v1811 = vld [vmem:[#allocation16 + $0x4] sm:$0xf]
    %v1812 = vld [vmem:[#allocation16 + $0x8] sm:$0xf]
    %v1813 = vld [vmem:[#allocation16 + $0xc] sm:$0xf]
    %v1814 = vld [vmem:[#allocation16 + $0x10] sm:$0xf]
    %v1815 = vld [vmem:[#allocation16 + $0x14] sm:$0xf]
    %v1816 = vld [vmem:[#allocation16 + $0x18] sm:$0xf]
    %v1817 = vld [vmem:[#allocation16 + $0x1c] sm:$0xf]
    %v1818 = vld [vmem:[%s12] sm:$0x1]
    %v1820 = vlaneseq
    %v1821 = vshrl.u32 %v1820, 7
    %v1822 = vsub.s32 0, %v1821
    %v1823 = vrot.slane %v1818, %v1822
    %v1833 = vunpack.c.l.b16 %v1810
    %v1834 = vunpack.c.l.b16 %v1811
    %v1835 = vunpack.c.l.b16 %v1812
    %v1836 = vunpack.c.l.b16 %v1813
    %v1837 = vunpack.c.l.b16 %v1814
    %v1838 = vunpack.c.l.b16 %v1815
    %v1839 = vunpack.c.l.b16 %v1816
    %v1840 = vunpack.c.l.b16 %v1817
    %v1841 = vpack.c.b16 %v1834, %v1833
    %v1842 = vpack.c.b16 %v1836, %v1835
    %v1843 = vpack.c.b16 %v1838, %v1837
    %v1844 = vpack.c.b16 %v1840, %v1839
    %v1850 = vsel %vm1676, %v1809, 0
    %1852 = vmatprep.subr.bf16.mxu0 0
    %1853 = vmatpush1.bf16.msra.mxu0 0
    %1854 = vmatprep.subr.bf16.mxu0 0
    %1855 = vmatpush1.bf16.msra.mxu0 0
    %1856 = vmatprep.subr.bf16.mxu0 0
    %1857 = vmatpush1.bf16.msra.mxu0 0
    %1858 = vmatprep.subr.bf16.mxu0 0
    %1859 = vmatpush1.bf16.msra.mxu0 0
    %1860 = vmatprep.subr.bf16.mxu0 0
    %1861 = vmatpush1.bf16.msra.mxu0 %v1844
    %1862 = vmatprep.subr.bf16.mxu0 0
    %1863 = vmatpush1.bf16.msra.mxu0 %v1843
    %1864 = vmatprep.subr.bf16.mxu0 0
    %1865 = vmatpush1.bf16.msra.mxu0 %v1842
    %1866 = vmatprep.subr.bf16.mxu0 0
    %1867 = vmatpush1.bf16.msra.mxu0 %v1841
    %1868 = vmatprep.subr.bf16.mxu0 0
    %1869 = vmatpush2.bf16.msra.mxu0 0
    %1870 = vmatprep.subr.bf16.mxu0 0
    %1871 = vmatpush2.bf16.msra.mxu0 0
    %1872 = vmatprep.subr.bf16.mxu0 0
    %1873 = vmatpush2.bf16.msra.mxu0 0
    %1874 = vmatprep.subr.bf16.mxu0 0
    %1875 = vmatpush2.bf16.msra.mxu0 0
    %1876 = vmatprep.subr.bf16.mxu0 0
    %1877 = vmatpush2.bf16.msra.mxu0 0
    %1878 = vmatprep.subr.bf16.mxu0 0
    %1879 = vmatpush2.bf16.msra.mxu0 0
    %1880 = vmatprep.subr.bf16.mxu0 0
    %1881 = vmatpush2.bf16.msra.mxu0 0
    %1882 = vmatprep.subr.bf16.mxu0 0
    %1883 = vmatpush2.bf16.msra.mxu0 0
    %1884 = vmatprep.mubr.bf16.mxu0 0
    %1885 = vmatmul.mubr.bf16.gmra.mxu0 %v1850
    %v1886 = vpop.f32.mrf.mxu0
    %v1887 = vadd.f32 %v1823, %v1886
    %v1888 = vpop.f32.mrf.mxu0
    %v1889 = vpop.f32.mrf.mxu0
    %v1890 = vadd.f32 %v1823, %v1889
    %v1891 = vpop.f32.mrf.mxu0
    %1892 = vdwg.mxu0
    %v1893 = vmax.f32 %v1887, 0.0
    %v1894 = vmax.f32 %v1890, 0.0
    %v1895 = vpack.c.bf16 %v1894, %v1893
    %v1896 = vld [vmem:[%s13] sm:$0xf]
    %v1897 = vld [vmem:[%s13 + $0x4] sm:$0xf]
    %v1898 = vld [vmem:[%s13 + $0x8] sm:$0xf]
    %v1899 = vld [vmem:[%s13 + $0xc] sm:$0xf]
    %v1900 = vld [vmem:[%s13 + $0x10] sm:$0xf]
    %v1901 = vld [vmem:[%s13 + $0x14] sm:$0xf]
    %v1902 = vld [vmem:[%s13 + $0x18] sm:$0xf]
    %v1903 = vld [vmem:[%s13 + $0x1c] sm:$0xf]
    %v1904 = vld [vmem:[%s14] sm:$0x1]
    %v1906 = vlaneseq
    %v1907 = vshrl.u32 %v1906, 7
    %v1908 = vsub.s32 0, %v1907
    %v1909 = vrot.slane %v1904, %v1908
    %v1919 = vunpack.c.l.b16 %v1896
    %v1920 = vunpack.c.l.b16 %v1897
    %v1921 = vunpack.c.l.b16 %v1898
    %v1922 = vunpack.c.l.b16 %v1899
    %v1923 = vunpack.c.l.b16 %v1900
    %v1924 = vunpack.c.l.b16 %v1901
    %v1925 = vunpack.c.l.b16 %v1902
    %v1926 = vunpack.c.l.b16 %v1903
    %v1927 = vpack.c.b16 %v1920, %v1919
    %v1928 = vpack.c.b16 %v1922, %v1921
    %v1929 = vpack.c.b16 %v1924, %v1923
    %v1930 = vpack.c.b16 %v1926, %v1925
    %v1936 = vsel %vm1676, %v1895, 0
    %1938 = vmatprep.subr.bf16.mxu0 0
    %1939 = vmatpush1.bf16.msra.mxu0 0
    %1940 = vmatprep.subr.bf16.mxu0 0
    %1941 = vmatpush1.bf16.msra.mxu0 0
    %1942 = vmatprep.subr.bf16.mxu0 0
    %1943 = vmatpush1.bf16.msra.mxu0 0
    %1944 = vmatprep.subr.bf16.mxu0 0
    %1945 = vmatpush1.bf16.msra.mxu0 0
    %1946 = vmatprep.subr.bf16.mxu0 0
    %1947 = vmatpush1.bf16.msra.mxu0 %v1930
    %1948 = vmatprep.subr.bf16.mxu0 0
    %1949 = vmatpush1.bf16.msra.mxu0 %v1929
    %1950 = vmatprep.subr.bf16.mxu0 0
    %1951 = vmatpush1.bf16.msra.mxu0 %v1928
    %1952 = vmatprep.subr.bf16.mxu0 0
    %1953 = vmatpush1.bf16.msra.mxu0 %v1927
    %1954 = vmatprep.subr.bf16.mxu0 0
    %1955 = vmatpush2.bf16.msra.mxu0 0
    %1956 = vmatprep.subr.bf16.mxu0 0
    %1957 = vmatpush2.bf16.msra.mxu0 0
    %1958 = vmatprep.subr.bf16.mxu0 0
    %1959 = vmatpush2.bf16.msra.mxu0 0
    %1960 = vmatprep.subr.bf16.mxu0 0
    %1961 = vmatpush2.bf16.msra.mxu0 0
    %1962 = vmatprep.subr.bf16.mxu0 0
    %1963 = vmatpush2.bf16.msra.mxu0 0
    %1964 = vmatprep.subr.bf16.mxu0 0
    %1965 = vmatpush2.bf16.msra.mxu0 0
    %1966 = vmatprep.subr.bf16.mxu0 0
    %1967 = vmatpush2.bf16.msra.mxu0 0
    %1968 = vmatprep.subr.bf16.mxu0 0
    %1969 = vmatpush2.bf16.msra.mxu0 0
    %1970 = vmatprep.mubr.bf16.mxu0 0
    %1971 = vmatmul.mubr.bf16.gmra.mxu0 %v1936
    %v1972 = vpop.f32.mrf.mxu0
    %v1973 = vadd.f32 %v1909, %v1972
    %v1974 = vpop.f32.mrf.mxu0
    %v1975 = vpop.f32.mrf.mxu0
    %v1976 = vadd.f32 %v1909, %v1975
    %v1977 = vpop.f32.mrf.mxu0
    %1978 = vdwg.mxu0
    %v1979 = vadd.f32 %v1506, %v1973
    %v1980 = vadd.f32 %v1507, %v1976
    %1981 = vst.msk [vmem:[#allocation17] sm:$0xff] %vm186, %v1979
    %1982 = vst.msk [vmem:[#allocation17 + $0x8] sm:$0xff] %vm186, %v1980
    // Predicated region
    $region114: #{tpu_custom_call.1} parent=1 // pred_check
      _
    $region115: #{tpu_custom_call.1} parent=1 // pred_check_branch
      %1984 = sbr.rel (0) target = $region117
    $region116: #{tpu_custom_call.1} parent=1 // pred_region
      %s1986 = ssub.s32 256, 256
      %1987 = vsyncadd [#allocation4], %s1986
      %s1988 = sshll.u32 [#allocation17], 4
      %s1989 = int_to_ptr.vmem [resolvable:$true] %s1988
      %1994 = dma.vmem_to_hbm [thread:$0]  %s1989, 256, %s19, [#allocation4], 128, 128, 8
    $region117: #{tpu_custom_call.1} parent=1 // pred_fallthru
      _
    // Predicated region
    $region118: #{tpu_custom_call.1} parent=1 // pred_check
      _
    $region119: #{tpu_custom_call.1} parent=1 // pred_check_branch
      %1996 = sbr.rel (0) target = $region121
    $region120: #{tpu_custom_call.1} parent=1 // pred_region
      %1997 = dma.done [#allocation4], 256
    $region121: #{tpu_custom_call.1} parent=1 // pred_fallthru
      _
    %1998 = vsyncpa [#allocation3], 1
    %1999 = vsyncpa [#allocation6], 1
    %2000 = vsyncpa [#allocation9], 1
    %2001 = vsyncpa [#allocation12], 1
    %2002 = vsyncpa [#allocation15], 1
    %2003 = vsyncpa [#allocation4], 1

</llo_original>
